<compile_context>
chip_gen: v5e
topology: v5e:2x2
jax: 0.10.0
libtpu: 0.0.40
codegen_flags: <defaults>
</compile_context>

<pallas_src>
import functools

import jax
import jax.numpy as jnp
from jax.experimental import pallas as pl
from jax.experimental.pallas import tpu as pltpu

N = 8            # number of nodes
E = 16           # number of edges
NODE_NF = 128    # node feature dim (== HIDDEN_NF so the residual h + node_mlp(...) is shape-valid)
HIDDEN_NF = 128  # lane-dense (128) feature dim
NORM_FACTOR = 1.0   # aggregation_method='sum', normalization_factor=1.0


def _swish(x):
    return x * jax.nn.sigmoid(x)


def gcl_kernel(ii_ref, jj_ref,                      # scalar-prefetched edge indices (SMEM)
               h_ref, ea_ref,
               we1_ref, be1_ref, we2_ref, be2_ref,
               wn1_ref, bn1_ref, wn2_ref, bn2_ref,
               hout_ref, ef_ref, *, compute_dtype):
    f32 = jnp.float32
    cd = compute_dtype
    n_nodes = h_ref.shape[0]
    n_edges = ea_ref.shape[0]

    def mm(a, b):
        # MXU matmul with f32 accumulation; operands optionally bf16 (v6e/v7x at scale).
        return jnp.dot(a.astype(cd), b.astype(cd), preferred_element_type=f32)

    # ---- one-hot gather / scatter matrices from SMEM-prefetched indices ----------------
    # Built as pure VPU compares/selects (no dynamic stores, no transposes); the edge loop
    # is a small static trip count, unrolled at trace time.
    e_ids_g = jax.lax.broadcasted_iota(jnp.int32, (n_edges, n_nodes), 0)
    n_ids_g = jax.lax.broadcasted_iota(jnp.int32, (n_edges, n_nodes), 1)
    n_ids_s = jax.lax.broadcasted_iota(jnp.int32, (n_nodes, n_edges), 0)
    e_ids_s = jax.lax.broadcasted_iota(jnp.int32, (n_nodes, n_edges), 1)

    gat_src = jnp.zeros((n_edges, n_nodes), f32)    # (E, N): row e selects node ii[e]
    gat_tgt = jnp.zeros((n_edges, n_nodes), f32)    # (E, N): row e selects node jj[e]
    seg_src = jnp.zeros((n_nodes, n_edges), f32)    # (N, E): gat_src transposed (segment sum)
    for e in range(n_edges):
        src = ii_ref[e]
        tgt = jj_ref[e]
        gat_src = jnp.where((e_ids_g == e) & (n_ids_g == src), 1.0, gat_src)
        gat_tgt = jnp.where((e_ids_g == e) & (n_ids_g == tgt), 1.0, gat_tgt)
        seg_src = jnp.where((e_ids_s == e) & (n_ids_s == src), 1.0, seg_src)

    h = h_ref[...]

    # ---- in-kernel gather on the MXU ----------------------------------------------------
    h_src = mm(gat_src, h)      # h[ii]
    h_tgt = mm(gat_tgt, h)      # h[jj]

    # ---- edge MLP: single fused Linear1 (K = 2*node_nf + hidden_nf) ---------------------
    x = jnp.concatenate([h_src, h_tgt, ea_ref[...]], axis=1)
    x = _swish(mm(x, we1_ref[...]) + be1_ref[...])
    mij = _swish(mm(x, we2_ref[...]) + be2_ref[...])      # edge_mlp: last layer IS activated
    edge_feat = mij                                       # attention=False, edge_mask=None
    ef_ref[...] = edge_feat

    # ---- unsorted_segment_sum on the MXU (1/norm_factor folded into wn1 at trace time) --
    agg = mm(seg_src, edge_feat)

    # ---- node MLP: single fused Linear1 (K = node_nf + hidden_nf), residual -------------
    y = jnp.concatenate([h, agg], axis=1)
    y = _swish(mm(y, wn1_ref[...]) + bn1_ref[...])
    y = mm(y, wn2_ref[...]) + bn2_ref[...]                # node_mlp: last layer NOT activated
    hout_ref[...] = h + y


def gcl_forward(h, edge_index, edge_attr, params, *, compute_dtype=jnp.float32):
    """Everything (gather, edge MLP, segment-sum, node MLP, residual) runs in one kernel."""
    ii, jj = edge_index
    n_nodes, node_nf = h.shape
    n_edges, _ = edge_attr.shape
    hidden_nf = params["we2"].shape[1]
    assert node_nf == hidden_nf, "residual h + node_mlp(...) requires node_nf == hidden_nf"

    # Fold 1/normalization_factor into the agg rows of the node-MLP first weight (exact).
    wn1 = params["wn1"].at[node_nf:, :].multiply(1.0 / NORM_FACTOR)

    tensor_args = (h, edge_attr,
                   params["we1"], params["be1"], params["we2"], params["be2"],
                   wn1, params["bn1"], params["wn2"], params["bn2"])

    def fullblock(shape):
        return pl.BlockSpec(shape, lambda i, ii_ref, jj_ref: (0,) * len(shape))

    grid_spec = pltpu.PrefetchScalarGridSpec(
        num_scalar_prefetch=2,        # ii, jj -> SMEM, available to the kernel as scalar refs
        grid=(1,),
        in_specs=[fullblock(a.shape) for a in tensor_args],
        out_specs=(fullblock((n_nodes, hidden_nf)),
                   fullblock((n_edges, hidden_nf))),
    )

    kernel = functools.partial(gcl_kernel, compute_dtype=compute_dtype)
    h_out, edge_feat = pl.pallas_call(
        kernel,
        out_shape=(jax.ShapeDtypeStruct((n_nodes, hidden_nf), jnp.float32),
                   jax.ShapeDtypeStruct((n_edges, hidden_nf), jnp.float32)),
        grid_spec=grid_spec,
        compiler_params=pltpu.CompilerParams(dimension_semantics=("arbitrary",)),
    )(ii.astype(jnp.int32), jj.astype(jnp.int32), *tensor_args)
    return h_out, edge_feat


def gcl_reference(h, edge_index, edge_attr, params):
    """Pure-JAX reference mirroring the PyTorch forward exactly."""
    ii, jj = edge_index
    x = jnp.concatenate([h[ii], h[jj], edge_attr], axis=1)
    x = jax.nn.silu(x @ params["we1"] + params["be1"])
    mij = jax.nn.silu(x @ params["we2"] + params["be2"])
    edge_feat = mij
    agg = jax.ops.segment_sum(edge_feat, ii, num_segments=h.shape[0]) / NORM_FACTOR
    a = jnp.concatenate([h, agg], axis=1)
    y = jax.nn.silu(a @ params["wn1"] + params["bn1"])
    y = y @ params["wn2"] + params["bn2"]
    return h + y, edge_feat


if __name__ == "__main__":
    key = jax.random.PRNGKey(0)
    keys = jax.random.split(key, 12)

    def init(k, shape, scale=0.1):
        return jax.random.normal(k, shape, jnp.float32) * scale

    params = {
        # edge_mlp Linear1: fused weight, in_dim = 2*NODE_NF + HIDDEN_NF
        "we1": init(keys[0], (2 * NODE_NF + HIDDEN_NF, HIDDEN_NF)),
        "be1": init(keys[1], (1, HIDDEN_NF)),
        "we2": init(keys[2], (HIDDEN_NF, HIDDEN_NF)),
        "be2": init(keys[3], (1, HIDDEN_NF)),
        # node_mlp Linear1: fused weight, in_dim = NODE_NF + HIDDEN_NF
        "wn1": init(keys[4], (NODE_NF + HIDDEN_NF, HIDDEN_NF)),
        "bn1": init(keys[5], (1, HIDDEN_NF)),
        "wn2": init(keys[6], (HIDDEN_NF, HIDDEN_NF)),
        "bn2": init(keys[7], (1, HIDDEN_NF)),
    }

    h = init(keys[8], (N, NODE_NF), scale=1.0)
    edge_attr = init(keys[9], (E, HIDDEN_NF), scale=1.0)
    # indices are within [0, N); out-of-range rows would be silently dropped
    # (same as jax.ops.segment_sum).
    ii = jnp.arange(E, dtype=jnp.int32) % N
    jj = (jnp.arange(E, dtype=jnp.int32) * 3 + 1) % N
    edge_index = (ii, jj)

    h_out, e_out = gcl_forward(h, edge_index, edge_attr, params)
    jax.block_until_ready((h_out, e_out))

    h_ref, e_ref = gcl_reference(h, edge_index, edge_attr, params)
    assert jnp.allclose(h_out, h_ref, atol=1e-4, rtol=1e-4), "node output mismatch"
    assert jnp.allclose(e_out, e_ref, atol=1e-4, rtol=1e-4), "edge output mismatch"
    print("KERNEL_OK")
</pallas_src>

<mosaic_0001>
module attributes {stable_mosaic.version = 11 : i64} {
  func.func @gcl_kernel(%arg0: i32, %arg1: memref<16xi32, #tpu.memory_space<smem>>, %arg2: memref<16xi32, #tpu.memory_space<smem>>, %arg3: memref<8x128xf32, #tpu.memory_space<vmem>>, %arg4: memref<16x128xf32, #tpu.memory_space<vmem>>, %arg5: memref<384x128xf32, #tpu.memory_space<vmem>>, %arg6: memref<1x128xf32, #tpu.memory_space<vmem>>, %arg7: memref<128x128xf32, #tpu.memory_space<vmem>>, %arg8: memref<1x128xf32, #tpu.memory_space<vmem>>, %arg9: memref<256x128xf32, #tpu.memory_space<vmem>>, %arg10: memref<1x128xf32, #tpu.memory_space<vmem>>, %arg11: memref<128x128xf32, #tpu.memory_space<vmem>>, %arg12: memref<1x128xf32, #tpu.memory_space<vmem>>, %arg13: memref<8x128xf32, #tpu.memory_space<vmem>>, %arg14: memref<16x128xf32, #tpu.memory_space<vmem>>) attributes {dimension_semantics = [#tpu.dimension_semantics<arbitrary>], iteration_bounds = array<i64: 1>, scalar_prefetch = 2 : i64, scratch_operands = 0 : i64, tpu.core_type = #tpu.core_type<tc>, window_params = [{pipeline_mode = #tpu.pipeline_mode<synchronous>, transform_indices = @transform_0, window_bounds = array<i64: 8, 128>}, {pipeline_mode = #tpu.pipeline_mode<synchronous>, transform_indices = @transform_1, window_bounds = array<i64: 16, 128>}, {pipeline_mode = #tpu.pipeline_mode<synchronous>, transform_indices = @transform_2, window_bounds = array<i64: 384, 128>}, {pipeline_mode = #tpu.pipeline_mode<synchronous>, transform_indices = @transform_3, window_bounds = array<i64: 1, 128>}, {pipeline_mode = #tpu.pipeline_mode<synchronous>, transform_indices = @transform_4, window_bounds = array<i64: 128, 128>}, {pipeline_mode = #tpu.pipeline_mode<synchronous>, transform_indices = @transform_5, window_bounds = array<i64: 1, 128>}, {pipeline_mode = #tpu.pipeline_mode<synchronous>, transform_indices = @transform_6, window_bounds = array<i64: 256, 128>}, {pipeline_mode = #tpu.pipeline_mode<synchronous>, transform_indices = @transform_7, window_bounds = array<i64: 1, 128>}, {pipeline_mode = #tpu.pipeline_mode<synchronous>, transform_indices = @transform_8, window_bounds = array<i64: 128, 128>}, {pipeline_mode = #tpu.pipeline_mode<synchronous>, transform_indices = @transform_9, window_bounds = array<i64: 1, 128>}, {pipeline_mode = #tpu.pipeline_mode<synchronous>, transform_indices = @transform_10, window_bounds = array<i64: 8, 128>}, {pipeline_mode = #tpu.pipeline_mode<synchronous>, transform_indices = @transform_11, window_bounds = array<i64: 16, 128>}]} {
    %0 = tpu.iota {dimensions = array<i32: 0>} : vector<16x8xi32>
    %1 = tpu.iota {dimensions = array<i32: 1>} : vector<16x8xi32>
    %2 = tpu.iota {dimensions = array<i32: 0>} : vector<8x16xi32>
    %3 = tpu.iota {dimensions = array<i32: 1>} : vector<8x16xi32>
    %cst = arith.constant 0.000000e+00 : f32
    %4 = vector.broadcast %cst : f32 to vector<16x8xf32>
    %cst_0 = arith.constant 0.000000e+00 : f32
    %5 = vector.broadcast %cst_0 : f32 to vector<16x8xf32>
    %cst_1 = arith.constant 0.000000e+00 : f32
    %6 = vector.broadcast %cst_1 : f32 to vector<8x16xf32>
    %c0 = arith.constant 0 : index
    %7 = memref.load %arg1[%c0] : memref<16xi32, #tpu.memory_space<smem>>
    %c0_2 = arith.constant 0 : index
    %8 = memref.load %arg2[%c0_2] : memref<16xi32, #tpu.memory_space<smem>>
    %c0_i32 = arith.constant 0 : i32
    %9 = vector.broadcast %c0_i32 : i32 to vector<16x8xi32>
    %10 = arith.cmpi eq, %0, %9 : vector<16x8xi32>
    %11 = vector.broadcast %7 : i32 to vector<16x8xi32>
    %12 = arith.cmpi eq, %1, %11 : vector<16x8xi32>
    %13 = arith.andi %10, %12 : vector<16x8xi1>
    %cst_3 = arith.constant 1.000000e+00 : f32
    %14 = vector.broadcast %cst_3 : f32 to vector<16x8xf32>
    %15 = arith.select %13, %14, %4 : vector<16x8xi1>, vector<16x8xf32>
    %c0_i32_4 = arith.constant 0 : i32
    %16 = vector.broadcast %c0_i32_4 : i32 to vector<16x8xi32>
    %17 = arith.cmpi eq, %0, %16 : vector<16x8xi32>
    %18 = vector.broadcast %8 : i32 to vector<16x8xi32>
    %19 = arith.cmpi eq, %1, %18 : vector<16x8xi32>
    %20 = arith.andi %17, %19 : vector<16x8xi1>
    %cst_5 = arith.constant 1.000000e+00 : f32
    %21 = vector.broadcast %cst_5 : f32 to vector<16x8xf32>
    %22 = arith.select %20, %21, %5 : vector<16x8xi1>, vector<16x8xf32>
    %c0_i32_6 = arith.constant 0 : i32
    %23 = vector.broadcast %c0_i32_6 : i32 to vector<8x16xi32>
    %24 = arith.cmpi eq, %3, %23 : vector<8x16xi32>
    %25 = vector.broadcast %7 : i32 to vector<8x16xi32>
    %26 = arith.cmpi eq, %2, %25 : vector<8x16xi32>
    %27 = arith.andi %24, %26 : vector<8x16xi1>
    %cst_7 = arith.constant 1.000000e+00 : f32
    %28 = vector.broadcast %cst_7 : f32 to vector<8x16xf32>
    %29 = arith.select %27, %28, %6 : vector<8x16xi1>, vector<8x16xf32>
    %c1 = arith.constant 1 : index
    %30 = memref.load %arg1[%c1] : memref<16xi32, #tpu.memory_space<smem>>
    %c1_8 = arith.constant 1 : index
    %31 = memref.load %arg2[%c1_8] : memref<16xi32, #tpu.memory_space<smem>>
    %c1_i32 = arith.constant 1 : i32
    %32 = vector.broadcast %c1_i32 : i32 to vector<16x8xi32>
    %33 = arith.cmpi eq, %0, %32 : vector<16x8xi32>
    %34 = vector.broadcast %30 : i32 to vector<16x8xi32>
    %35 = arith.cmpi eq, %1, %34 : vector<16x8xi32>
    %36 = arith.andi %33, %35 : vector<16x8xi1>
    %cst_9 = arith.constant 1.000000e+00 : f32
    %37 = vector.broadcast %cst_9 : f32 to vector<16x8xf32>
    %38 = arith.select %36, %37, %15 : vector<16x8xi1>, vector<16x8xf32>
    %c1_i32_10 = arith.constant 1 : i32
    %39 = vector.broadcast %c1_i32_10 : i32 to vector<16x8xi32>
    %40 = arith.cmpi eq, %0, %39 : vector<16x8xi32>
    %41 = vector.broadcast %31 : i32 to vector<16x8xi32>
    %42 = arith.cmpi eq, %1, %41 : vector<16x8xi32>
    %43 = arith.andi %40, %42 : vector<16x8xi1>
    %cst_11 = arith.constant 1.000000e+00 : f32
    %44 = vector.broadcast %cst_11 : f32 to vector<16x8xf32>
    %45 = arith.select %43, %44, %22 : vector<16x8xi1>, vector<16x8xf32>
    %c1_i32_12 = arith.constant 1 : i32
    %46 = vector.broadcast %c1_i32_12 : i32 to vector<8x16xi32>
    %47 = arith.cmpi eq, %3, %46 : vector<8x16xi32>
    %48 = vector.broadcast %30 : i32 to vector<8x16xi32>
    %49 = arith.cmpi eq, %2, %48 : vector<8x16xi32>
    %50 = arith.andi %47, %49 : vector<8x16xi1>
    %cst_13 = arith.constant 1.000000e+00 : f32
    %51 = vector.broadcast %cst_13 : f32 to vector<8x16xf32>
    %52 = arith.select %50, %51, %29 : vector<8x16xi1>, vector<8x16xf32>
    %c2 = arith.constant 2 : index
    %53 = memref.load %arg1[%c2] : memref<16xi32, #tpu.memory_space<smem>>
    %c2_14 = arith.constant 2 : index
    %54 = memref.load %arg2[%c2_14] : memref<16xi32, #tpu.memory_space<smem>>
    %c2_i32 = arith.constant 2 : i32
    %55 = vector.broadcast %c2_i32 : i32 to vector<16x8xi32>
    %56 = arith.cmpi eq, %0, %55 : vector<16x8xi32>
    %57 = vector.broadcast %53 : i32 to vector<16x8xi32>
    %58 = arith.cmpi eq, %1, %57 : vector<16x8xi32>
    %59 = arith.andi %56, %58 : vector<16x8xi1>
    %cst_15 = arith.constant 1.000000e+00 : f32
    %60 = vector.broadcast %cst_15 : f32 to vector<16x8xf32>
    %61 = arith.select %59, %60, %38 : vector<16x8xi1>, vector<16x8xf32>
    %c2_i32_16 = arith.constant 2 : i32
    %62 = vector.broadcast %c2_i32_16 : i32 to vector<16x8xi32>
    %63 = arith.cmpi eq, %0, %62 : vector<16x8xi32>
    %64 = vector.broadcast %54 : i32 to vector<16x8xi32>
    %65 = arith.cmpi eq, %1, %64 : vector<16x8xi32>
    %66 = arith.andi %63, %65 : vector<16x8xi1>
    %cst_17 = arith.constant 1.000000e+00 : f32
    %67 = vector.broadcast %cst_17 : f32 to vector<16x8xf32>
    %68 = arith.select %66, %67, %45 : vector<16x8xi1>, vector<16x8xf32>
    %c2_i32_18 = arith.constant 2 : i32
    %69 = vector.broadcast %c2_i32_18 : i32 to vector<8x16xi32>
    %70 = arith.cmpi eq, %3, %69 : vector<8x16xi32>
    %71 = vector.broadcast %53 : i32 to vector<8x16xi32>
    %72 = arith.cmpi eq, %2, %71 : vector<8x16xi32>
    %73 = arith.andi %70, %72 : vector<8x16xi1>
    %cst_19 = arith.constant 1.000000e+00 : f32
    %74 = vector.broadcast %cst_19 : f32 to vector<8x16xf32>
    %75 = arith.select %73, %74, %52 : vector<8x16xi1>, vector<8x16xf32>
    %c3 = arith.constant 3 : index
    %76 = memref.load %arg1[%c3] : memref<16xi32, #tpu.memory_space<smem>>
    %c3_20 = arith.constant 3 : index
    %77 = memref.load %arg2[%c3_20] : memref<16xi32, #tpu.memory_space<smem>>
    %c3_i32 = arith.constant 3 : i32
    %78 = vector.broadcast %c3_i32 : i32 to vector<16x8xi32>
    %79 = arith.cmpi eq, %0, %78 : vector<16x8xi32>
    %80 = vector.broadcast %76 : i32 to vector<16x8xi32>
    %81 = arith.cmpi eq, %1, %80 : vector<16x8xi32>
    %82 = arith.andi %79, %81 : vector<16x8xi1>
    %cst_21 = arith.constant 1.000000e+00 : f32
    %83 = vector.broadcast %cst_21 : f32 to vector<16x8xf32>
    %84 = arith.select %82, %83, %61 : vector<16x8xi1>, vector<16x8xf32>
    %c3_i32_22 = arith.constant 3 : i32
    %85 = vector.broadcast %c3_i32_22 : i32 to vector<16x8xi32>
    %86 = arith.cmpi eq, %0, %85 : vector<16x8xi32>
    %87 = vector.broadcast %77 : i32 to vector<16x8xi32>
    %88 = arith.cmpi eq, %1, %87 : vector<16x8xi32>
    %89 = arith.andi %86, %88 : vector<16x8xi1>
    %cst_23 = arith.constant 1.000000e+00 : f32
    %90 = vector.broadcast %cst_23 : f32 to vector<16x8xf32>
    %91 = arith.select %89, %90, %68 : vector<16x8xi1>, vector<16x8xf32>
    %c3_i32_24 = arith.constant 3 : i32
    %92 = vector.broadcast %c3_i32_24 : i32 to vector<8x16xi32>
    %93 = arith.cmpi eq, %3, %92 : vector<8x16xi32>
    %94 = vector.broadcast %76 : i32 to vector<8x16xi32>
    %95 = arith.cmpi eq, %2, %94 : vector<8x16xi32>
    %96 = arith.andi %93, %95 : vector<8x16xi1>
    %cst_25 = arith.constant 1.000000e+00 : f32
    %97 = vector.broadcast %cst_25 : f32 to vector<8x16xf32>
    %98 = arith.select %96, %97, %75 : vector<8x16xi1>, vector<8x16xf32>
    %c4 = arith.constant 4 : index
    %99 = memref.load %arg1[%c4] : memref<16xi32, #tpu.memory_space<smem>>
    %c4_26 = arith.constant 4 : index
    %100 = memref.load %arg2[%c4_26] : memref<16xi32, #tpu.memory_space<smem>>
    %c4_i32 = arith.constant 4 : i32
    %101 = vector.broadcast %c4_i32 : i32 to vector<16x8xi32>
    %102 = arith.cmpi eq, %0, %101 : vector<16x8xi32>
    %103 = vector.broadcast %99 : i32 to vector<16x8xi32>
    %104 = arith.cmpi eq, %1, %103 : vector<16x8xi32>
    %105 = arith.andi %102, %104 : vector<16x8xi1>
    %cst_27 = arith.constant 1.000000e+00 : f32
    %106 = vector.broadcast %cst_27 : f32 to vector<16x8xf32>
    %107 = arith.select %105, %106, %84 : vector<16x8xi1>, vector<16x8xf32>
    %c4_i32_28 = arith.constant 4 : i32
    %108 = vector.broadcast %c4_i32_28 : i32 to vector<16x8xi32>
    %109 = arith.cmpi eq, %0, %108 : vector<16x8xi32>
    %110 = vector.broadcast %100 : i32 to vector<16x8xi32>
    %111 = arith.cmpi eq, %1, %110 : vector<16x8xi32>
    %112 = arith.andi %109, %111 : vector<16x8xi1>
    %cst_29 = arith.constant 1.000000e+00 : f32
    %113 = vector.broadcast %cst_29 : f32 to vector<16x8xf32>
    %114 = arith.select %112, %113, %91 : vector<16x8xi1>, vector<16x8xf32>
    %c4_i32_30 = arith.constant 4 : i32
    %115 = vector.broadcast %c4_i32_30 : i32 to vector<8x16xi32>
    %116 = arith.cmpi eq, %3, %115 : vector<8x16xi32>
    %117 = vector.broadcast %99 : i32 to vector<8x16xi32>
    %118 = arith.cmpi eq, %2, %117 : vector<8x16xi32>
    %119 = arith.andi %116, %118 : vector<8x16xi1>
    %cst_31 = arith.constant 1.000000e+00 : f32
    %120 = vector.broadcast %cst_31 : f32 to vector<8x16xf32>
    %121 = arith.select %119, %120, %98 : vector<8x16xi1>, vector<8x16xf32>
    %c5 = arith.constant 5 : index
    %122 = memref.load %arg1[%c5] : memref<16xi32, #tpu.memory_space<smem>>
    %c5_32 = arith.constant 5 : index
    %123 = memref.load %arg2[%c5_32] : memref<16xi32, #tpu.memory_space<smem>>
    %c5_i32 = arith.constant 5 : i32
    %124 = vector.broadcast %c5_i32 : i32 to vector<16x8xi32>
    %125 = arith.cmpi eq, %0, %124 : vector<16x8xi32>
    %126 = vector.broadcast %122 : i32 to vector<16x8xi32>
    %127 = arith.cmpi eq, %1, %126 : vector<16x8xi32>
    %128 = arith.andi %125, %127 : vector<16x8xi1>
    %cst_33 = arith.constant 1.000000e+00 : f32
    %129 = vector.broadcast %cst_33 : f32 to vector<16x8xf32>
    %130 = arith.select %128, %129, %107 : vector<16x8xi1>, vector<16x8xf32>
    %c5_i32_34 = arith.constant 5 : i32
    %131 = vector.broadcast %c5_i32_34 : i32 to vector<16x8xi32>
    %132 = arith.cmpi eq, %0, %131 : vector<16x8xi32>
    %133 = vector.broadcast %123 : i32 to vector<16x8xi32>
    %134 = arith.cmpi eq, %1, %133 : vector<16x8xi32>
    %135 = arith.andi %132, %134 : vector<16x8xi1>
    %cst_35 = arith.constant 1.000000e+00 : f32
    %136 = vector.broadcast %cst_35 : f32 to vector<16x8xf32>
    %137 = arith.select %135, %136, %114 : vector<16x8xi1>, vector<16x8xf32>
    %c5_i32_36 = arith.constant 5 : i32
    %138 = vector.broadcast %c5_i32_36 : i32 to vector<8x16xi32>
    %139 = arith.cmpi eq, %3, %138 : vector<8x16xi32>
    %140 = vector.broadcast %122 : i32 to vector<8x16xi32>
    %141 = arith.cmpi eq, %2, %140 : vector<8x16xi32>
    %142 = arith.andi %139, %141 : vector<8x16xi1>
    %cst_37 = arith.constant 1.000000e+00 : f32
    %143 = vector.broadcast %cst_37 : f32 to vector<8x16xf32>
    %144 = arith.select %142, %143, %121 : vector<8x16xi1>, vector<8x16xf32>
    %c6 = arith.constant 6 : index
    %145 = memref.load %arg1[%c6] : memref<16xi32, #tpu.memory_space<smem>>
    %c6_38 = arith.constant 6 : index
    %146 = memref.load %arg2[%c6_38] : memref<16xi32, #tpu.memory_space<smem>>
    %c6_i32 = arith.constant 6 : i32
    %147 = vector.broadcast %c6_i32 : i32 to vector<16x8xi32>
    %148 = arith.cmpi eq, %0, %147 : vector<16x8xi32>
    %149 = vector.broadcast %145 : i32 to vector<16x8xi32>
    %150 = arith.cmpi eq, %1, %149 : vector<16x8xi32>
    %151 = arith.andi %148, %150 : vector<16x8xi1>
    %cst_39 = arith.constant 1.000000e+00 : f32
    %152 = vector.broadcast %cst_39 : f32 to vector<16x8xf32>
    %153 = arith.select %151, %152, %130 : vector<16x8xi1>, vector<16x8xf32>
    %c6_i32_40 = arith.constant 6 : i32
    %154 = vector.broadcast %c6_i32_40 : i32 to vector<16x8xi32>
    %155 = arith.cmpi eq, %0, %154 : vector<16x8xi32>
    %156 = vector.broadcast %146 : i32 to vector<16x8xi32>
    %157 = arith.cmpi eq, %1, %156 : vector<16x8xi32>
    %158 = arith.andi %155, %157 : vector<16x8xi1>
    %cst_41 = arith.constant 1.000000e+00 : f32
    %159 = vector.broadcast %cst_41 : f32 to vector<16x8xf32>
    %160 = arith.select %158, %159, %137 : vector<16x8xi1>, vector<16x8xf32>
    %c6_i32_42 = arith.constant 6 : i32
    %161 = vector.broadcast %c6_i32_42 : i32 to vector<8x16xi32>
    %162 = arith.cmpi eq, %3, %161 : vector<8x16xi32>
    %163 = vector.broadcast %145 : i32 to vector<8x16xi32>
    %164 = arith.cmpi eq, %2, %163 : vector<8x16xi32>
    %165 = arith.andi %162, %164 : vector<8x16xi1>
    %cst_43 = arith.constant 1.000000e+00 : f32
    %166 = vector.broadcast %cst_43 : f32 to vector<8x16xf32>
    %167 = arith.select %165, %166, %144 : vector<8x16xi1>, vector<8x16xf32>
    %c7 = arith.constant 7 : index
    %168 = memref.load %arg1[%c7] : memref<16xi32, #tpu.memory_space<smem>>
    %c7_44 = arith.constant 7 : index
    %169 = memref.load %arg2[%c7_44] : memref<16xi32, #tpu.memory_space<smem>>
    %c7_i32 = arith.constant 7 : i32
    %170 = vector.broadcast %c7_i32 : i32 to vector<16x8xi32>
    %171 = arith.cmpi eq, %0, %170 : vector<16x8xi32>
    %172 = vector.broadcast %168 : i32 to vector<16x8xi32>
    %173 = arith.cmpi eq, %1, %172 : vector<16x8xi32>
    %174 = arith.andi %171, %173 : vector<16x8xi1>
    %cst_45 = arith.constant 1.000000e+00 : f32
    %175 = vector.broadcast %cst_45 : f32 to vector<16x8xf32>
    %176 = arith.select %174, %175, %153 : vector<16x8xi1>, vector<16x8xf32>
    %c7_i32_46 = arith.constant 7 : i32
    %177 = vector.broadcast %c7_i32_46 : i32 to vector<16x8xi32>
    %178 = arith.cmpi eq, %0, %177 : vector<16x8xi32>
    %179 = vector.broadcast %169 : i32 to vector<16x8xi32>
    %180 = arith.cmpi eq, %1, %179 : vector<16x8xi32>
    %181 = arith.andi %178, %180 : vector<16x8xi1>
    %cst_47 = arith.constant 1.000000e+00 : f32
    %182 = vector.broadcast %cst_47 : f32 to vector<16x8xf32>
    %183 = arith.select %181, %182, %160 : vector<16x8xi1>, vector<16x8xf32>
    %c7_i32_48 = arith.constant 7 : i32
    %184 = vector.broadcast %c7_i32_48 : i32 to vector<8x16xi32>
    %185 = arith.cmpi eq, %3, %184 : vector<8x16xi32>
    %186 = vector.broadcast %168 : i32 to vector<8x16xi32>
    %187 = arith.cmpi eq, %2, %186 : vector<8x16xi32>
    %188 = arith.andi %185, %187 : vector<8x16xi1>
    %cst_49 = arith.constant 1.000000e+00 : f32
    %189 = vector.broadcast %cst_49 : f32 to vector<8x16xf32>
    %190 = arith.select %188, %189, %167 : vector<8x16xi1>, vector<8x16xf32>
    %c8 = arith.constant 8 : index
    %191 = memref.load %arg1[%c8] : memref<16xi32, #tpu.memory_space<smem>>
    %c8_50 = arith.constant 8 : index
    %192 = memref.load %arg2[%c8_50] : memref<16xi32, #tpu.memory_space<smem>>
    %c8_i32 = arith.constant 8 : i32
    %193 = vector.broadcast %c8_i32 : i32 to vector<16x8xi32>
    %194 = arith.cmpi eq, %0, %193 : vector<16x8xi32>
    %195 = vector.broadcast %191 : i32 to vector<16x8xi32>
    %196 = arith.cmpi eq, %1, %195 : vector<16x8xi32>
    %197 = arith.andi %194, %196 : vector<16x8xi1>
    %cst_51 = arith.constant 1.000000e+00 : f32
    %198 = vector.broadcast %cst_51 : f32 to vector<16x8xf32>
    %199 = arith.select %197, %198, %176 : vector<16x8xi1>, vector<16x8xf32>
    %c8_i32_52 = arith.constant 8 : i32
    %200 = vector.broadcast %c8_i32_52 : i32 to vector<16x8xi32>
    %201 = arith.cmpi eq, %0, %200 : vector<16x8xi32>
    %202 = vector.broadcast %192 : i32 to vector<16x8xi32>
    %203 = arith.cmpi eq, %1, %202 : vector<16x8xi32>
    %204 = arith.andi %201, %203 : vector<16x8xi1>
    %cst_53 = arith.constant 1.000000e+00 : f32
    %205 = vector.broadcast %cst_53 : f32 to vector<16x8xf32>
    %206 = arith.select %204, %205, %183 : vector<16x8xi1>, vector<16x8xf32>
    %c8_i32_54 = arith.constant 8 : i32
    %207 = vector.broadcast %c8_i32_54 : i32 to vector<8x16xi32>
    %208 = arith.cmpi eq, %3, %207 : vector<8x16xi32>
    %209 = vector.broadcast %191 : i32 to vector<8x16xi32>
    %210 = arith.cmpi eq, %2, %209 : vector<8x16xi32>
    %211 = arith.andi %208, %210 : vector<8x16xi1>
    %cst_55 = arith.constant 1.000000e+00 : f32
    %212 = vector.broadcast %cst_55 : f32 to vector<8x16xf32>
    %213 = arith.select %211, %212, %190 : vector<8x16xi1>, vector<8x16xf32>
    %c9 = arith.constant 9 : index
    %214 = memref.load %arg1[%c9] : memref<16xi32, #tpu.memory_space<smem>>
    %c9_56 = arith.constant 9 : index
    %215 = memref.load %arg2[%c9_56] : memref<16xi32, #tpu.memory_space<smem>>
    %c9_i32 = arith.constant 9 : i32
    %216 = vector.broadcast %c9_i32 : i32 to vector<16x8xi32>
    %217 = arith.cmpi eq, %0, %216 : vector<16x8xi32>
    %218 = vector.broadcast %214 : i32 to vector<16x8xi32>
    %219 = arith.cmpi eq, %1, %218 : vector<16x8xi32>
    %220 = arith.andi %217, %219 : vector<16x8xi1>
    %cst_57 = arith.constant 1.000000e+00 : f32
    %221 = vector.broadcast %cst_57 : f32 to vector<16x8xf32>
    %222 = arith.select %220, %221, %199 : vector<16x8xi1>, vector<16x8xf32>
    %c9_i32_58 = arith.constant 9 : i32
    %223 = vector.broadcast %c9_i32_58 : i32 to vector<16x8xi32>
    %224 = arith.cmpi eq, %0, %223 : vector<16x8xi32>
    %225 = vector.broadcast %215 : i32 to vector<16x8xi32>
    %226 = arith.cmpi eq, %1, %225 : vector<16x8xi32>
    %227 = arith.andi %224, %226 : vector<16x8xi1>
    %cst_59 = arith.constant 1.000000e+00 : f32
    %228 = vector.broadcast %cst_59 : f32 to vector<16x8xf32>
    %229 = arith.select %227, %228, %206 : vector<16x8xi1>, vector<16x8xf32>
    %c9_i32_60 = arith.constant 9 : i32
    %230 = vector.broadcast %c9_i32_60 : i32 to vector<8x16xi32>
    %231 = arith.cmpi eq, %3, %230 : vector<8x16xi32>
    %232 = vector.broadcast %214 : i32 to vector<8x16xi32>
    %233 = arith.cmpi eq, %2, %232 : vector<8x16xi32>
    %234 = arith.andi %231, %233 : vector<8x16xi1>
    %cst_61 = arith.constant 1.000000e+00 : f32
    %235 = vector.broadcast %cst_61 : f32 to vector<8x16xf32>
    %236 = arith.select %234, %235, %213 : vector<8x16xi1>, vector<8x16xf32>
    %c10 = arith.constant 10 : index
    %237 = memref.load %arg1[%c10] : memref<16xi32, #tpu.memory_space<smem>>
    %c10_62 = arith.constant 10 : index
    %238 = memref.load %arg2[%c10_62] : memref<16xi32, #tpu.memory_space<smem>>
    %c10_i32 = arith.constant 10 : i32
    %239 = vector.broadcast %c10_i32 : i32 to vector<16x8xi32>
    %240 = arith.cmpi eq, %0, %239 : vector<16x8xi32>
    %241 = vector.broadcast %237 : i32 to vector<16x8xi32>
    %242 = arith.cmpi eq, %1, %241 : vector<16x8xi32>
    %243 = arith.andi %240, %242 : vector<16x8xi1>
    %cst_63 = arith.constant 1.000000e+00 : f32
    %244 = vector.broadcast %cst_63 : f32 to vector<16x8xf32>
    %245 = arith.select %243, %244, %222 : vector<16x8xi1>, vector<16x8xf32>
    %c10_i32_64 = arith.constant 10 : i32
    %246 = vector.broadcast %c10_i32_64 : i32 to vector<16x8xi32>
    %247 = arith.cmpi eq, %0, %246 : vector<16x8xi32>
    %248 = vector.broadcast %238 : i32 to vector<16x8xi32>
    %249 = arith.cmpi eq, %1, %248 : vector<16x8xi32>
    %250 = arith.andi %247, %249 : vector<16x8xi1>
    %cst_65 = arith.constant 1.000000e+00 : f32
    %251 = vector.broadcast %cst_65 : f32 to vector<16x8xf32>
    %252 = arith.select %250, %251, %229 : vector<16x8xi1>, vector<16x8xf32>
    %c10_i32_66 = arith.constant 10 : i32
    %253 = vector.broadcast %c10_i32_66 : i32 to vector<8x16xi32>
    %254 = arith.cmpi eq, %3, %253 : vector<8x16xi32>
    %255 = vector.broadcast %237 : i32 to vector<8x16xi32>
    %256 = arith.cmpi eq, %2, %255 : vector<8x16xi32>
    %257 = arith.andi %254, %256 : vector<8x16xi1>
    %cst_67 = arith.constant 1.000000e+00 : f32
    %258 = vector.broadcast %cst_67 : f32 to vector<8x16xf32>
    %259 = arith.select %257, %258, %236 : vector<8x16xi1>, vector<8x16xf32>
    %c11 = arith.constant 11 : index
    %260 = memref.load %arg1[%c11] : memref<16xi32, #tpu.memory_space<smem>>
    %c11_68 = arith.constant 11 : index
    %261 = memref.load %arg2[%c11_68] : memref<16xi32, #tpu.memory_space<smem>>
    %c11_i32 = arith.constant 11 : i32
    %262 = vector.broadcast %c11_i32 : i32 to vector<16x8xi32>
    %263 = arith.cmpi eq, %0, %262 : vector<16x8xi32>
    %264 = vector.broadcast %260 : i32 to vector<16x8xi32>
    %265 = arith.cmpi eq, %1, %264 : vector<16x8xi32>
    %266 = arith.andi %263, %265 : vector<16x8xi1>
    %cst_69 = arith.constant 1.000000e+00 : f32
    %267 = vector.broadcast %cst_69 : f32 to vector<16x8xf32>
    %268 = arith.select %266, %267, %245 : vector<16x8xi1>, vector<16x8xf32>
    %c11_i32_70 = arith.constant 11 : i32
    %269 = vector.broadcast %c11_i32_70 : i32 to vector<16x8xi32>
    %270 = arith.cmpi eq, %0, %269 : vector<16x8xi32>
    %271 = vector.broadcast %261 : i32 to vector<16x8xi32>
    %272 = arith.cmpi eq, %1, %271 : vector<16x8xi32>
    %273 = arith.andi %270, %272 : vector<16x8xi1>
    %cst_71 = arith.constant 1.000000e+00 : f32
    %274 = vector.broadcast %cst_71 : f32 to vector<16x8xf32>
    %275 = arith.select %273, %274, %252 : vector<16x8xi1>, vector<16x8xf32>
    %c11_i32_72 = arith.constant 11 : i32
    %276 = vector.broadcast %c11_i32_72 : i32 to vector<8x16xi32>
    %277 = arith.cmpi eq, %3, %276 : vector<8x16xi32>
    %278 = vector.broadcast %260 : i32 to vector<8x16xi32>
    %279 = arith.cmpi eq, %2, %278 : vector<8x16xi32>
    %280 = arith.andi %277, %279 : vector<8x16xi1>
    %cst_73 = arith.constant 1.000000e+00 : f32
    %281 = vector.broadcast %cst_73 : f32 to vector<8x16xf32>
    %282 = arith.select %280, %281, %259 : vector<8x16xi1>, vector<8x16xf32>
    %c12 = arith.constant 12 : index
    %283 = memref.load %arg1[%c12] : memref<16xi32, #tpu.memory_space<smem>>
    %c12_74 = arith.constant 12 : index
    %284 = memref.load %arg2[%c12_74] : memref<16xi32, #tpu.memory_space<smem>>
    %c12_i32 = arith.constant 12 : i32
    %285 = vector.broadcast %c12_i32 : i32 to vector<16x8xi32>
    %286 = arith.cmpi eq, %0, %285 : vector<16x8xi32>
    %287 = vector.broadcast %283 : i32 to vector<16x8xi32>
    %288 = arith.cmpi eq, %1, %287 : vector<16x8xi32>
    %289 = arith.andi %286, %288 : vector<16x8xi1>
    %cst_75 = arith.constant 1.000000e+00 : f32
    %290 = vector.broadcast %cst_75 : f32 to vector<16x8xf32>
    %291 = arith.select %289, %290, %268 : vector<16x8xi1>, vector<16x8xf32>
    %c12_i32_76 = arith.constant 12 : i32
    %292 = vector.broadcast %c12_i32_76 : i32 to vector<16x8xi32>
    %293 = arith.cmpi eq, %0, %292 : vector<16x8xi32>
    %294 = vector.broadcast %284 : i32 to vector<16x8xi32>
    %295 = arith.cmpi eq, %1, %294 : vector<16x8xi32>
    %296 = arith.andi %293, %295 : vector<16x8xi1>
    %cst_77 = arith.constant 1.000000e+00 : f32
    %297 = vector.broadcast %cst_77 : f32 to vector<16x8xf32>
    %298 = arith.select %296, %297, %275 : vector<16x8xi1>, vector<16x8xf32>
    %c12_i32_78 = arith.constant 12 : i32
    %299 = vector.broadcast %c12_i32_78 : i32 to vector<8x16xi32>
    %300 = arith.cmpi eq, %3, %299 : vector<8x16xi32>
    %301 = vector.broadcast %283 : i32 to vector<8x16xi32>
    %302 = arith.cmpi eq, %2, %301 : vector<8x16xi32>
    %303 = arith.andi %300, %302 : vector<8x16xi1>
    %cst_79 = arith.constant 1.000000e+00 : f32
    %304 = vector.broadcast %cst_79 : f32 to vector<8x16xf32>
    %305 = arith.select %303, %304, %282 : vector<8x16xi1>, vector<8x16xf32>
    %c13 = arith.constant 13 : index
    %306 = memref.load %arg1[%c13] : memref<16xi32, #tpu.memory_space<smem>>
    %c13_80 = arith.constant 13 : index
    %307 = memref.load %arg2[%c13_80] : memref<16xi32, #tpu.memory_space<smem>>
    %c13_i32 = arith.constant 13 : i32
    %308 = vector.broadcast %c13_i32 : i32 to vector<16x8xi32>
    %309 = arith.cmpi eq, %0, %308 : vector<16x8xi32>
    %310 = vector.broadcast %306 : i32 to vector<16x8xi32>
    %311 = arith.cmpi eq, %1, %310 : vector<16x8xi32>
    %312 = arith.andi %309, %311 : vector<16x8xi1>
    %cst_81 = arith.constant 1.000000e+00 : f32
    %313 = vector.broadcast %cst_81 : f32 to vector<16x8xf32>
    %314 = arith.select %312, %313, %291 : vector<16x8xi1>, vector<16x8xf32>
    %c13_i32_82 = arith.constant 13 : i32
    %315 = vector.broadcast %c13_i32_82 : i32 to vector<16x8xi32>
    %316 = arith.cmpi eq, %0, %315 : vector<16x8xi32>
    %317 = vector.broadcast %307 : i32 to vector<16x8xi32>
    %318 = arith.cmpi eq, %1, %317 : vector<16x8xi32>
    %319 = arith.andi %316, %318 : vector<16x8xi1>
    %cst_83 = arith.constant 1.000000e+00 : f32
    %320 = vector.broadcast %cst_83 : f32 to vector<16x8xf32>
    %321 = arith.select %319, %320, %298 : vector<16x8xi1>, vector<16x8xf32>
    %c13_i32_84 = arith.constant 13 : i32
    %322 = vector.broadcast %c13_i32_84 : i32 to vector<8x16xi32>
    %323 = arith.cmpi eq, %3, %322 : vector<8x16xi32>
    %324 = vector.broadcast %306 : i32 to vector<8x16xi32>
    %325 = arith.cmpi eq, %2, %324 : vector<8x16xi32>
    %326 = arith.andi %323, %325 : vector<8x16xi1>
    %cst_85 = arith.constant 1.000000e+00 : f32
    %327 = vector.broadcast %cst_85 : f32 to vector<8x16xf32>
    %328 = arith.select %326, %327, %305 : vector<8x16xi1>, vector<8x16xf32>
    %c14 = arith.constant 14 : index
    %329 = memref.load %arg1[%c14] : memref<16xi32, #tpu.memory_space<smem>>
    %c14_86 = arith.constant 14 : index
    %330 = memref.load %arg2[%c14_86] : memref<16xi32, #tpu.memory_space<smem>>
    %c14_i32 = arith.constant 14 : i32
    %331 = vector.broadcast %c14_i32 : i32 to vector<16x8xi32>
    %332 = arith.cmpi eq, %0, %331 : vector<16x8xi32>
    %333 = vector.broadcast %329 : i32 to vector<16x8xi32>
    %334 = arith.cmpi eq, %1, %333 : vector<16x8xi32>
    %335 = arith.andi %332, %334 : vector<16x8xi1>
    %cst_87 = arith.constant 1.000000e+00 : f32
    %336 = vector.broadcast %cst_87 : f32 to vector<16x8xf32>
    %337 = arith.select %335, %336, %314 : vector<16x8xi1>, vector<16x8xf32>
    %c14_i32_88 = arith.constant 14 : i32
    %338 = vector.broadcast %c14_i32_88 : i32 to vector<16x8xi32>
    %339 = arith.cmpi eq, %0, %338 : vector<16x8xi32>
    %340 = vector.broadcast %330 : i32 to vector<16x8xi32>
    %341 = arith.cmpi eq, %1, %340 : vector<16x8xi32>
    %342 = arith.andi %339, %341 : vector<16x8xi1>
    %cst_89 = arith.constant 1.000000e+00 : f32
    %343 = vector.broadcast %cst_89 : f32 to vector<16x8xf32>
    %344 = arith.select %342, %343, %321 : vector<16x8xi1>, vector<16x8xf32>
    %c14_i32_90 = arith.constant 14 : i32
    %345 = vector.broadcast %c14_i32_90 : i32 to vector<8x16xi32>
    %346 = arith.cmpi eq, %3, %345 : vector<8x16xi32>
    %347 = vector.broadcast %329 : i32 to vector<8x16xi32>
    %348 = arith.cmpi eq, %2, %347 : vector<8x16xi32>
    %349 = arith.andi %346, %348 : vector<8x16xi1>
    %cst_91 = arith.constant 1.000000e+00 : f32
    %350 = vector.broadcast %cst_91 : f32 to vector<8x16xf32>
    %351 = arith.select %349, %350, %328 : vector<8x16xi1>, vector<8x16xf32>
    %c15 = arith.constant 15 : index
    %352 = memref.load %arg1[%c15] : memref<16xi32, #tpu.memory_space<smem>>
    %c15_92 = arith.constant 15 : index
    %353 = memref.load %arg2[%c15_92] : memref<16xi32, #tpu.memory_space<smem>>
    %c15_i32 = arith.constant 15 : i32
    %354 = vector.broadcast %c15_i32 : i32 to vector<16x8xi32>
    %355 = arith.cmpi eq, %0, %354 : vector<16x8xi32>
    %356 = vector.broadcast %352 : i32 to vector<16x8xi32>
    %357 = arith.cmpi eq, %1, %356 : vector<16x8xi32>
    %358 = arith.andi %355, %357 : vector<16x8xi1>
    %cst_93 = arith.constant 1.000000e+00 : f32
    %359 = vector.broadcast %cst_93 : f32 to vector<16x8xf32>
    %360 = arith.select %358, %359, %337 : vector<16x8xi1>, vector<16x8xf32>
    %c15_i32_94 = arith.constant 15 : i32
    %361 = vector.broadcast %c15_i32_94 : i32 to vector<16x8xi32>
    %362 = arith.cmpi eq, %0, %361 : vector<16x8xi32>
    %363 = vector.broadcast %353 : i32 to vector<16x8xi32>
    %364 = arith.cmpi eq, %1, %363 : vector<16x8xi32>
    %365 = arith.andi %362, %364 : vector<16x8xi1>
    %cst_95 = arith.constant 1.000000e+00 : f32
    %366 = vector.broadcast %cst_95 : f32 to vector<16x8xf32>
    %367 = arith.select %365, %366, %344 : vector<16x8xi1>, vector<16x8xf32>
    %c15_i32_96 = arith.constant 15 : i32
    %368 = vector.broadcast %c15_i32_96 : i32 to vector<8x16xi32>
    %369 = arith.cmpi eq, %3, %368 : vector<8x16xi32>
    %370 = vector.broadcast %352 : i32 to vector<8x16xi32>
    %371 = arith.cmpi eq, %2, %370 : vector<8x16xi32>
    %372 = arith.andi %369, %371 : vector<8x16xi1>
    %cst_97 = arith.constant 1.000000e+00 : f32
    %373 = vector.broadcast %cst_97 : f32 to vector<8x16xf32>
    %374 = arith.select %372, %373, %351 : vector<8x16xi1>, vector<8x16xf32>
    %c0_98 = arith.constant 0 : index
    %c0_99 = arith.constant 0 : index
    %375 = vector.load %arg3[%c0_98, %c0_99] : memref<8x128xf32, #tpu.memory_space<vmem>>, vector<8x128xf32>
    %cst_100 = arith.constant dense<0.000000e+00> : vector<16x128xf32>
    %376 = tpu.matmul %360, %375, %cst_100 {dimension_numbers = #tpu.dot_dimension_numbers<[1], [0], [0], [1], [0, 0, 1, 1], [], []>} : vector<16x8xf32>, vector<8x128xf32>, vector<16x128xf32> -> vector<16x128xf32>
    %cst_101 = arith.constant dense<0.000000e+00> : vector<16x128xf32>
    %377 = tpu.matmul %367, %375, %cst_101 {dimension_numbers = #tpu.dot_dimension_numbers<[1], [0], [0], [1], [0, 0, 1, 1], [], []>} : vector<16x8xf32>, vector<8x128xf32>, vector<16x128xf32> -> vector<16x128xf32>
    %c0_102 = arith.constant 0 : index
    %c0_103 = arith.constant 0 : index
    %378 = vector.load %arg4[%c0_102, %c0_103] : memref<16x128xf32, #tpu.memory_space<vmem>>, vector<16x128xf32>
    %379 = tpu.concatenate %376, %377, %378 in 1 : vector<16x128xf32>, vector<16x128xf32>, vector<16x128xf32> -> vector<16x384xf32>
    %c0_104 = arith.constant 0 : index
    %c0_105 = arith.constant 0 : index
    %380 = vector.load %arg5[%c0_104, %c0_105] : memref<384x128xf32, #tpu.memory_space<vmem>>, vector<384x128xf32>
    %cst_106 = arith.constant dense<0.000000e+00> : vector<16x128xf32>
    %381 = tpu.matmul %379, %380, %cst_106 {dimension_numbers = #tpu.dot_dimension_numbers<[1], [0], [0], [1], [0, 0, 1, 1], [], []>} : vector<16x384xf32>, vector<384x128xf32>, vector<16x128xf32> -> vector<16x128xf32>
    %c0_107 = arith.constant 0 : index
    %c0_108 = arith.constant 0 : index
    %382 = vector.load %arg6[%c0_107, %c0_108] : memref<1x128xf32, #tpu.memory_space<vmem>>, vector<1x128xf32>
    %383 = vector.broadcast %382 : vector<1x128xf32> to vector<16x128xf32>
    %384 = arith.addf %381, %383 : vector<16x128xf32>
    %385 = arith.negf %384 : vector<16x128xf32>
    %386 = math.exp %385 : vector<16x128xf32>
    %cst_109 = arith.constant 1.000000e+00 : f32
    %387 = vector.broadcast %cst_109 : f32 to vector<16x128xf32>
    %388 = arith.addf %387, %386 : vector<16x128xf32>
    %389 = arith.divf %387, %388 : vector<16x128xf32>
    %390 = arith.mulf %384, %389 : vector<16x128xf32>
    %c0_110 = arith.constant 0 : index
    %c0_111 = arith.constant 0 : index
    %391 = vector.load %arg7[%c0_110, %c0_111] : memref<128x128xf32, #tpu.memory_space<vmem>>, vector<128x128xf32>
    %cst_112 = arith.constant dense<0.000000e+00> : vector<16x128xf32>
    %392 = tpu.matmul %390, %391, %cst_112 {dimension_numbers = #tpu.dot_dimension_numbers<[1], [0], [0], [1], [0, 0, 1, 1], [], []>} : vector<16x128xf32>, vector<128x128xf32>, vector<16x128xf32> -> vector<16x128xf32>
    %c0_113 = arith.constant 0 : index
    %c0_114 = arith.constant 0 : index
    %393 = vector.load %arg8[%c0_113, %c0_114] : memref<1x128xf32, #tpu.memory_space<vmem>>, vector<1x128xf32>
    %394 = vector.broadcast %393 : vector<1x128xf32> to vector<16x128xf32>
    %395 = arith.addf %392, %394 : vector<16x128xf32>
    %396 = arith.negf %395 : vector<16x128xf32>
    %397 = math.exp %396 : vector<16x128xf32>
    %cst_115 = arith.constant 1.000000e+00 : f32
    %398 = vector.broadcast %cst_115 : f32 to vector<16x128xf32>
    %399 = arith.addf %398, %397 : vector<16x128xf32>
    %400 = arith.divf %398, %399 : vector<16x128xf32>
    %401 = arith.mulf %395, %400 : vector<16x128xf32>
    %c0_116 = arith.constant 0 : index
    %c0_117 = arith.constant 0 : index
    %402 = vector.load %arg14[%c0_116, %c0_117] : memref<16x128xf32, #tpu.memory_space<vmem>>, vector<16x128xf32>
    tpu.vector_store %arg14[%c0_116, %c0_117], %401 {strides = array<i32>} : memref<16x128xf32, #tpu.memory_space<vmem>>, vector<16x128xf32>,
    %cst_118 = arith.constant dense<0.000000e+00> : vector<8x128xf32>
    %403 = tpu.matmul %374, %401, %cst_118 {dimension_numbers = #tpu.dot_dimension_numbers<[1], [0], [0], [1], [0, 0, 1, 1], [], []>} : vector<8x16xf32>, vector<16x128xf32>, vector<8x128xf32> -> vector<8x128xf32>
    %404 = tpu.concatenate %375, %403 in 1 : vector<8x128xf32>, vector<8x128xf32> -> vector<8x256xf32>
    %c0_119 = arith.constant 0 : index
    %c0_120 = arith.constant 0 : index
    %405 = vector.load %arg9[%c0_119, %c0_120] : memref<256x128xf32, #tpu.memory_space<vmem>>, vector<256x128xf32>
    %cst_121 = arith.constant dense<0.000000e+00> : vector<8x128xf32>
    %406 = tpu.matmul %404, %405, %cst_121 {dimension_numbers = #tpu.dot_dimension_numbers<[1], [0], [0], [1], [0, 0, 1, 1], [], []>} : vector<8x256xf32>, vector<256x128xf32>, vector<8x128xf32> -> vector<8x128xf32>
    %c0_122 = arith.constant 0 : index
    %c0_123 = arith.constant 0 : index
    %407 = vector.load %arg10[%c0_122, %c0_123] : memref<1x128xf32, #tpu.memory_space<vmem>>, vector<1x128xf32>
    %408 = vector.broadcast %407 : vector<1x128xf32> to vector<8x128xf32>
    %409 = arith.addf %406, %408 : vector<8x128xf32>
    %410 = arith.negf %409 : vector<8x128xf32>
    %411 = math.exp %410 : vector<8x128xf32>
    %cst_124 = arith.constant 1.000000e+00 : f32
    %412 = vector.broadcast %cst_124 : f32 to vector<8x128xf32>
    %413 = arith.addf %412, %411 : vector<8x128xf32>
    %414 = arith.divf %412, %413 : vector<8x128xf32>
    %415 = arith.mulf %409, %414 : vector<8x128xf32>
    %c0_125 = arith.constant 0 : index
    %c0_126 = arith.constant 0 : index
    %416 = vector.load %arg11[%c0_125, %c0_126] : memref<128x128xf32, #tpu.memory_space<vmem>>, vector<128x128xf32>
    %cst_127 = arith.constant dense<0.000000e+00> : vector<8x128xf32>
    %417 = tpu.matmul %415, %416, %cst_127 {dimension_numbers = #tpu.dot_dimension_numbers<[1], [0], [0], [1], [0, 0, 1, 1], [], []>} : vector<8x128xf32>, vector<128x128xf32>, vector<8x128xf32> -> vector<8x128xf32>
    %c0_128 = arith.constant 0 : index
    %c0_129 = arith.constant 0 : index
    %418 = vector.load %arg12[%c0_128, %c0_129] : memref<1x128xf32, #tpu.memory_space<vmem>>, vector<1x128xf32>
    %419 = vector.broadcast %418 : vector<1x128xf32> to vector<8x128xf32>
    %420 = arith.addf %417, %419 : vector<8x128xf32>
    %421 = arith.addf %375, %420 : vector<8x128xf32>
    %c0_130 = arith.constant 0 : index
    %c0_131 = arith.constant 0 : index
    %422 = vector.load %arg13[%c0_130, %c0_131] : memref<8x128xf32, #tpu.memory_space<vmem>>, vector<8x128xf32>
    tpu.vector_store %arg13[%c0_130, %c0_131], %421 {strides = array<i32>} : memref<8x128xf32, #tpu.memory_space<vmem>>, vector<8x128xf32>,
    return
  }
  func.func @transform_0(%arg0: i32, %arg1: memref<16xi32, #tpu.memory_space<smem>>, %arg2: memref<16xi32, #tpu.memory_space<smem>>) -> (i32, i32) {
    %c0_i32 = arith.constant 0 : i32
    %c0_i32_0 = arith.constant 0 : i32
    %c0_i32_1 = arith.constant 0 : i32
    return %c0_i32, %c0_i32_0 : i32, i32
  }
  func.func @transform_1(%arg0: i32, %arg1: memref<16xi32, #tpu.memory_space<smem>>, %arg2: memref<16xi32, #tpu.memory_space<smem>>) -> (i32, i32) {
    %c0_i32 = arith.constant 0 : i32
    %c0_i32_0 = arith.constant 0 : i32
    %c0_i32_1 = arith.constant 0 : i32
    return %c0_i32, %c0_i32_0 : i32, i32
  }
  func.func @transform_2(%arg0: i32, %arg1: memref<16xi32, #tpu.memory_space<smem>>, %arg2: memref<16xi32, #tpu.memory_space<smem>>) -> (i32, i32) {
    %c0_i32 = arith.constant 0 : i32
    %c0_i32_0 = arith.constant 0 : i32
    %c0_i32_1 = arith.constant 0 : i32
    return %c0_i32, %c0_i32_0 : i32, i32
  }
  func.func @transform_3(%arg0: i32, %arg1: memref<16xi32, #tpu.memory_space<smem>>, %arg2: memref<16xi32, #tpu.memory_space<smem>>) -> (i32, i32) {
    %c0_i32 = arith.constant 0 : i32
    %c0_i32_0 = arith.constant 0 : i32
    %c0_i32_1 = arith.constant 0 : i32
    return %c0_i32, %c0_i32_0 : i32, i32
  }
  func.func @transform_4(%arg0: i32, %arg1: memref<16xi32, #tpu.memory_space<smem>>, %arg2: memref<16xi32, #tpu.memory_space<smem>>) -> (i32, i32) {
    %c0_i32 = arith.constant 0 : i32
    %c0_i32_0 = arith.constant 0 : i32
    %c0_i32_1 = arith.constant 0 : i32
    return %c0_i32, %c0_i32_0 : i32, i32
  }
  func.func @transform_5(%arg0: i32, %arg1: memref<16xi32, #tpu.memory_space<smem>>, %arg2: memref<16xi32, #tpu.memory_space<smem>>) -> (i32, i32) {
    %c0_i32 = arith.constant 0 : i32
    %c0_i32_0 = arith.constant 0 : i32
    %c0_i32_1 = arith.constant 0 : i32
    return %c0_i32, %c0_i32_0 : i32, i32
  }
  func.func @transform_6(%arg0: i32, %arg1: memref<16xi32, #tpu.memory_space<smem>>, %arg2: memref<16xi32, #tpu.memory_space<smem>>) -> (i32, i32) {
    %c0_i32 = arith.constant 0 : i32
    %c0_i32_0 = arith.constant 0 : i32
    %c0_i32_1 = arith.constant 0 : i32
    return %c0_i32, %c0_i32_0 : i32, i32
  }
  func.func @transform_7(%arg0: i32, %arg1: memref<16xi32, #tpu.memory_space<smem>>, %arg2: memref<16xi32, #tpu.memory_space<smem>>) -> (i32, i32) {
    %c0_i32 = arith.constant 0 : i32
    %c0_i32_0 = arith.constant 0 : i32
    %c0_i32_1 = arith.constant 0 : i32
    return %c0_i32, %c0_i32_0 : i32, i32
  }
  func.func @transform_8(%arg0: i32, %arg1: memref<16xi32, #tpu.memory_space<smem>>, %arg2: memref<16xi32, #tpu.memory_space<smem>>) -> (i32, i32) {
    %c0_i32 = arith.constant 0 : i32
    %c0_i32_0 = arith.constant 0 : i32
    %c0_i32_1 = arith.constant 0 : i32
    return %c0_i32, %c0_i32_0 : i32, i32
  }
  func.func @transform_9(%arg0: i32, %arg1: memref<16xi32, #tpu.memory_space<smem>>, %arg2: memref<16xi32, #tpu.memory_space<smem>>) -> (i32, i32) {
    %c0_i32 = arith.constant 0 : i32
    %c0_i32_0 = arith.constant 0 : i32
    %c0_i32_1 = arith.constant 0 : i32
    return %c0_i32, %c0_i32_0 : i32, i32
  }
  func.func @transform_10(%arg0: i32, %arg1: memref<16xi32, #tpu.memory_space<smem>>, %arg2: memref<16xi32, #tpu.memory_space<smem>>) -> (i32, i32) {
    %c0_i32 = arith.constant 0 : i32
    %c0_i32_0 = arith.constant 0 : i32
    %c0_i32_1 = arith.constant 0 : i32
    return %c0_i32, %c0_i32_0 : i32, i32
  }
  func.func @transform_11(%arg0: i32, %arg1: memref<16xi32, #tpu.memory_space<smem>>, %arg2: memref<16xi32, #tpu.memory_space<smem>>) -> (i32, i32) {
    %c0_i32 = arith.constant 0 : i32
    %c0_i32_0 = arith.constant 0 : i32
    %c0_i32_1 = arith.constant 0 : i32
    return %c0_i32, %c0_i32_0 : i32, i32
  }
}

</mosaic_0001>

<llo_original>
// kernel: tpu_custom_call.1
$region0: #{tpu_custom_call.1}
  #allocation0 [shape = 'u32[]', space=smem, size = 0x4, offset = 0x4, fixed_abs, tag = 'smem constant byte address 0x4 - core index']
  #allocation1 [shape = 'u32[72,128]{1,0:T(1,128)}', space=vmem, size = 0x9000, scoped, tag = 'internal scratch']
  #allocation2 [shape = 's32[1]{0}', space=sflag, size = 0x4, scoped, tag = 'scoped memory for tpu_custom_call.1']
  #allocation3 [shape = 'u8[512]{0}', space=smem, size = 0x200, scoped, tag = 'prefetched SMEM operand 0']
  #allocation4 [shape = 'u8[512]{0}', space=smem, size = 0x200, scoped, tag = 'prefetched SMEM operand 1']
  %s0 = inlined_call_operand.hbm [shape: s32[16], index: 0, kind: input, shape index: {}]
  %s1 = inlined_call_operand.hbm [shape: s32[16], index: 1, kind: input, shape index: {}]
  %s2 = inlined_call_operand.hbm [shape: f32[8,128], index: 2, kind: input, shape index: {}]
  %s3 = inlined_call_operand.hbm [shape: f32[16,128], index: 3, kind: input, shape index: {}]
  %s4 = inlined_call_operand.hbm [shape: f32[384,128], index: 4, kind: input, shape index: {}]
  %s5 = inlined_call_operand.vmem [shape: f32[1,128], index: 5, kind: input, shape index: {}]
  %s6 = inlined_call_operand.hbm [shape: f32[128,128], index: 6, kind: input, shape index: {}]
  %s7 = inlined_call_operand.vmem [shape: f32[1,128], index: 7, kind: input, shape index: {}]
  %s8 = inlined_call_operand.hbm [shape: f32[256,128], index: 8, kind: input, shape index: {}]
  %s9 = inlined_call_operand.vmem [shape: f32[1,128], index: 9, kind: input, shape index: {}]
  %s10 = inlined_call_operand.hbm [shape: f32[128,128], index: 10, kind: input, shape index: {}]
  %s11 = inlined_call_operand.vmem [shape: f32[1,128], index: 11, kind: input, shape index: {}]
  %s12 = inlined_call_operand.hbm [shape: f32[8,128], index: 12, kind: output, shape index: {0}]
  %s13 = inlined_call_operand.hbm [shape: f32[16,128], index: 13, kind: output, shape index: {1}]
  %14 = xla_tuple %s12, %s13
  %s15 = sld [smem:[#allocation0]]
  $region82: #{tpu_custom_call.1} parent=0
    _
  %s17 = ssub.s32 1, %s15
  %s18 = scalar_select 0, %s17, %s15
  %s20 = sshll.u32 %s0, 4
  %s21 = int_to_ptr.hbm [resolvable:$true] %s20
  %23 = dma.hbm_to_smem %s21, 16, [#allocation3], [#allocation2]
  %s25 = sshll.u32 %s1, 4
  %s26 = int_to_ptr.hbm [resolvable:$true] %s25
  %28 = dma.hbm_to_smem %s26, 16, [#allocation4], [#allocation2]
  %30 = dma.done [#allocation2], 32
  %31 = sfence
  $region1: #{tpu_custom_call.1} parent=0
    #allocation5 [shape = 'u8[4096]{0}', space=vmem, size = 0x1000, scoped, tag = 'input window, operand 2, single buffered']
    #allocation6 [shape = 's32[1]{0}', space=sflag, size = 0x4, scoped, tag = 'scoped memory for tpu_custom_call.1']
    #allocation7 [shape = 's32[1]{0}', space=sflag, size = 0x4, scoped, tag = 'scoped memory for tpu_custom_call.1']
    #allocation8 [shape = 'u8[8192]{0}', space=vmem, size = 0x2000, scoped, tag = 'input window, operand 3, single buffered']
    #allocation9 [shape = 's32[1]{0}', space=sflag, size = 0x4, scoped, tag = 'scoped memory for tpu_custom_call.1']
    #allocation10 [shape = 'u8[196608]{0}', space=vmem, size = 0x30000, scoped, tag = 'input window, operand 4, single buffered']
    #allocation11 [shape = 'u8[65536]{0}', space=vmem, size = 0x10000, scoped, tag = 'input window, operand 6, single buffered']
    #allocation12 [shape = 's32[1]{0}', space=sflag, size = 0x4, scoped, tag = 'scoped memory for tpu_custom_call.1']
    #allocation13 [shape = 'u8[131072]{0}', space=vmem, size = 0x20000, scoped, tag = 'input window, operand 8, single buffered']
    #allocation14 [shape = 'u8[65536]{0}', space=vmem, size = 0x10000, scoped, tag = 'input window, operand 10, single buffered']
    #allocation15 [shape = 's32[1]{0}', space=sflag, size = 0x4, scoped, tag = 'scoped memory for tpu_custom_call.1']
    #allocation16 [shape = 'u8[4096]{0}', space=vmem, size = 0x1000, scoped, tag = 'output window, operand 0, single buffered']
    #allocation17 [shape = 'u8[8192]{0}', space=vmem, size = 0x2000, scoped, tag = 'output window, operand 1, single buffered']
    #allocation18 [shape = 's32[1]{0}', space=sflag, size = 0x4, scoped, tag = 'scoped memory for tpu_custom_call.1']
    %32 = vsyncpa [#allocation6], 0
    %33 = vsyncpa [#allocation9], 0
    %34 = vsyncpa [#allocation12], 0
    %35 = vsyncpa [#allocation15], 0
    %36 = vsyncpa [#allocation7], 0
    %37 = vsyncpa [#allocation18], 0
    // Predicated region
    $region2: #{tpu_custom_call.1} parent=1 // pred_check
      _
    $region3: #{tpu_custom_call.1} parent=1 // pred_check_branch
      %39 = sbr.rel (0) target = $region5
    $region4: #{tpu_custom_call.1} parent=1 // pred_region
      %41 = vsyncadd [#allocation6], 0
      %s43 = sshll.u32 %s2, 4
      %s44 = int_to_ptr.hbm [resolvable:$true] %s43
      %s45 = sshll.u32 [#allocation5], 4
      %s46 = int_to_ptr.vmem [resolvable:$true] %s45
      %48 = dma.hbm_to_vmem [thread:$0]  %s44, 128, %s46, [#allocation6]
    $region5: #{tpu_custom_call.1} parent=1 // pred_fallthru
      _
    // Predicated region
    $region6: #{tpu_custom_call.1} parent=1 // pred_check
      _
    $region7: #{tpu_custom_call.1} parent=1 // pred_check_branch
      %50 = sbr.rel (0) target = $region9
    $region8: #{tpu_custom_call.1} parent=1 // pred_region
      %52 = vsyncadd [#allocation9], 0
      %s53 = sshll.u32 %s3, 4
      %s54 = int_to_ptr.hbm [resolvable:$true] %s53
      %s55 = sshll.u32 [#allocation8], 4
      %s56 = int_to_ptr.vmem [resolvable:$true] %s55
      %61 = dma.hbm_to_vmem [thread:$0]  %s54, 256, %s56, [#allocation9], 128, 128, 8
    $region9: #{tpu_custom_call.1} parent=1 // pred_fallthru
      _
    // Predicated region
    $region10: #{tpu_custom_call.1} parent=1 // pred_check
      _
    $region11: #{tpu_custom_call.1} parent=1 // pred_check_branch
      %63 = sbr.rel (0) target = $region13
    $region12: #{tpu_custom_call.1} parent=1 // pred_region
      %65 = vsyncadd [#allocation9], 0
      %s66 = sshll.u32 %s4, 4
      %s67 = int_to_ptr.hbm [resolvable:$true] %s66
      %s68 = sshll.u32 [#allocation10], 4
      %s69 = int_to_ptr.vmem [resolvable:$true] %s68
      %74 = dma.hbm_to_vmem [thread:$0]  %s67, 6144, %s69, [#allocation9], 128, 128, 8
    $region13: #{tpu_custom_call.1} parent=1 // pred_fallthru
      _
    // Predicated region
    $region14: #{tpu_custom_call.1} parent=1 // pred_check
      _
    $region15: #{tpu_custom_call.1} parent=1 // pred_check_branch
      %76 = sbr.rel (0) target = $region17
    $region16: #{tpu_custom_call.1} parent=1 // pred_region
      _
    $region17: #{tpu_custom_call.1} parent=1 // pred_fallthru
      _
    // Predicated region
    $region18: #{tpu_custom_call.1} parent=1 // pred_check
      _
    $region19: #{tpu_custom_call.1} parent=1 // pred_check_branch
      %78 = sbr.rel (0) target = $region21
    $region20: #{tpu_custom_call.1} parent=1 // pred_region
      %80 = vsyncadd [#allocation12], 0
      %s81 = sshll.u32 %s6, 4
      %s82 = int_to_ptr.hbm [resolvable:$true] %s81
      %s83 = sshll.u32 [#allocation11], 4
      %s84 = int_to_ptr.vmem [resolvable:$true] %s83
      %89 = dma.hbm_to_vmem [thread:$0]  %s82, 2048, %s84, [#allocation12], 128, 128, 8
    $region21: #{tpu_custom_call.1} parent=1 // pred_fallthru
      _
    // Predicated region
    $region22: #{tpu_custom_call.1} parent=1 // pred_check
      _
    $region23: #{tpu_custom_call.1} parent=1 // pred_check_branch
      %91 = sbr.rel (0) target = $region25
    $region24: #{tpu_custom_call.1} parent=1 // pred_region
      _
    $region25: #{tpu_custom_call.1} parent=1 // pred_fallthru
      _
    // Predicated region
    $region26: #{tpu_custom_call.1} parent=1 // pred_check
      _
    $region27: #{tpu_custom_call.1} parent=1 // pred_check_branch
      %93 = sbr.rel (0) target = $region29
    $region28: #{tpu_custom_call.1} parent=1 // pred_region
      %95 = vsyncadd [#allocation12], 0
      %s96 = sshll.u32 %s8, 4
      %s97 = int_to_ptr.hbm [resolvable:$true] %s96
      %s98 = sshll.u32 [#allocation13], 4
      %s99 = int_to_ptr.vmem [resolvable:$true] %s98
      %104 = dma.hbm_to_vmem [thread:$0]  %s97, 4096, %s99, [#allocation12], 128, 128, 8
    $region29: #{tpu_custom_call.1} parent=1 // pred_fallthru
      _
    // Predicated region
    $region30: #{tpu_custom_call.1} parent=1 // pred_check
      _
    $region31: #{tpu_custom_call.1} parent=1 // pred_check_branch
      %106 = sbr.rel (0) target = $region33
    $region32: #{tpu_custom_call.1} parent=1 // pred_region
      _
    $region33: #{tpu_custom_call.1} parent=1 // pred_fallthru
      _
    // Predicated region
    $region34: #{tpu_custom_call.1} parent=1 // pred_check
      _
    $region35: #{tpu_custom_call.1} parent=1 // pred_check_branch
      %108 = sbr.rel (0) target = $region37
    $region36: #{tpu_custom_call.1} parent=1 // pred_region
      %110 = vsyncadd [#allocation15], 0
      %s111 = sshll.u32 %s10, 4
      %s112 = int_to_ptr.hbm [resolvable:$true] %s111
      %s113 = sshll.u32 [#allocation14], 4
      %s114 = int_to_ptr.vmem [resolvable:$true] %s113
      %119 = dma.hbm_to_vmem [thread:$0]  %s112, 2048, %s114, [#allocation15], 128, 128, 8
    $region37: #{tpu_custom_call.1} parent=1 // pred_fallthru
      _
    // Predicated region
    $region38: #{tpu_custom_call.1} parent=1 // pred_check
      _
    $region39: #{tpu_custom_call.1} parent=1 // pred_check_branch
      %121 = sbr.rel (0) target = $region41
    $region40: #{tpu_custom_call.1} parent=1 // pred_region
      _
    $region41: #{tpu_custom_call.1} parent=1 // pred_fallthru
      _
    // Predicated region
    $region42: #{tpu_custom_call.1} parent=1 // pred_check
      _
    $region43: #{tpu_custom_call.1} parent=1 // pred_check_branch
      %123 = sbr.rel (0) target = $region45
    $region44: #{tpu_custom_call.1} parent=1 // pred_region
      %125 = dma.done [#allocation6], 128
    $region45: #{tpu_custom_call.1} parent=1 // pred_fallthru
      _
    // Predicated region
    $region46: #{tpu_custom_call.1} parent=1 // pred_check
      _
    $region47: #{tpu_custom_call.1} parent=1 // pred_check_branch
      %127 = sbr.rel (0) target = $region49
    $region48: #{tpu_custom_call.1} parent=1 // pred_region
      %129 = dma.done [#allocation9], 256
    $region49: #{tpu_custom_call.1} parent=1 // pred_fallthru
      _
    // Predicated region
    $region50: #{tpu_custom_call.1} parent=1 // pred_check
      _
    $region51: #{tpu_custom_call.1} parent=1 // pred_check_branch
      %131 = sbr.rel (0) target = $region53
    $region52: #{tpu_custom_call.1} parent=1 // pred_region
      %133 = dma.done [#allocation9], 6144
    $region53: #{tpu_custom_call.1} parent=1 // pred_fallthru
      _
    // Predicated region
    $region54: #{tpu_custom_call.1} parent=1 // pred_check
      _
    $region55: #{tpu_custom_call.1} parent=1 // pred_check_branch
      %135 = sbr.rel (0) target = $region57
    $region56: #{tpu_custom_call.1} parent=1 // pred_region
      %137 = dma.done [#allocation12], 2048
    $region57: #{tpu_custom_call.1} parent=1 // pred_fallthru
      _
    // Predicated region
    $region58: #{tpu_custom_call.1} parent=1 // pred_check
      _
    $region59: #{tpu_custom_call.1} parent=1 // pred_check_branch
      %139 = sbr.rel (0) target = $region61
    $region60: #{tpu_custom_call.1} parent=1 // pred_region
      %141 = dma.done [#allocation12], 4096
    $region61: #{tpu_custom_call.1} parent=1 // pred_fallthru
      _
    // Predicated region
    $region62: #{tpu_custom_call.1} parent=1 // pred_check
      _
    $region63: #{tpu_custom_call.1} parent=1 // pred_check_branch
      %143 = sbr.rel (0) target = $region65
    $region64: #{tpu_custom_call.1} parent=1 // pred_region
      %145 = dma.done [#allocation15], 2048
    $region65: #{tpu_custom_call.1} parent=1 // pred_fallthru
      _
    %v146 = vlaneseq
    %v147 = vshrl.u32 %v146, 7
    %v148 = vadd.s32 %v147, 8
    %v149 = vlaneseq
    %v150 = vand.u32 %v149, 127
    %s151 = sld [smem:[#allocation3]]
    %s152 = sld [smem:[#allocation4]]
    %vm153 = vcmp.eq.s32.totalorder %v147, 0
    %vm154 = vcmp.eq.s32.totalorder %v148, 0
    %v155 = vstv %s151
    %vm156 = vcmp.eq.s32.totalorder %v150, %v155
    %vm157 = vmand %vm153, %vm156
    %vm158 = vmand %vm154, %vm156
    %v159 = vsel %vm157, 1.0, 0.0
    %v160 = vsel %vm158, 1.0, 0.0
    %v161 = vstv %s152
    %vm162 = vcmp.eq.s32.totalorder %v150, %v161
    %vm163 = vmand %vm153, %vm162
    %vm164 = vmand %vm154, %vm162
    %v165 = vsel %vm163, 1.0, 0.0
    %v166 = vsel %vm164, 1.0, 0.0
    %vm167 = vcmp.eq.s32.totalorder %v150, 0
    %vm168 = vcmp.eq.s32.totalorder %v147, %v155
    %vm169 = vmand %vm167, %vm168
    %v170 = vsel %vm169, 1.0, 0.0
    %s171 = sld [smem:[#allocation3 + $0x1]]
    %s172 = sld [smem:[#allocation4 + $0x1]]
    %vm173 = vcmp.eq.s32.totalorder %v147, 1
    %vm174 = vcmp.eq.s32.totalorder %v148, 1
    %v175 = vstv %s171
    %vm176 = vcmp.eq.s32.totalorder %v150, %v175
    %vm177 = vmand %vm173, %vm176
    %vm178 = vmand %vm174, %vm176
    %v179 = vsel %vm177, 1.0, %v159
    %v180 = vsel %vm178, 1.0, %v160
    %v181 = vstv %s172
    %vm182 = vcmp.eq.s32.totalorder %v150, %v181
    %vm183 = vmand %vm173, %vm182
    %vm184 = vmand %vm174, %vm182
    %v185 = vsel %vm183, 1.0, %v165
    %v186 = vsel %vm184, 1.0, %v166
    %vm187 = vcmp.eq.s32.totalorder %v150, 1
    %vm188 = vcmp.eq.s32.totalorder %v147, %v175
    %vm189 = vmand %vm187, %vm188
    %v190 = vsel %vm189, 1.0, %v170
    %s191 = sld [smem:[#allocation3 + $0x2]]
    %s192 = sld [smem:[#allocation4 + $0x2]]
    %vm193 = vcmp.eq.s32.totalorder %v147, 2
    %vm194 = vcmp.eq.s32.totalorder %v148, 2
    %v195 = vstv %s191
    %vm196 = vcmp.eq.s32.totalorder %v150, %v195
    %vm197 = vmand %vm193, %vm196
    %vm198 = vmand %vm194, %vm196
    %v199 = vsel %vm197, 1.0, %v179
    %v200 = vsel %vm198, 1.0, %v180
    %v201 = vstv %s192
    %vm202 = vcmp.eq.s32.totalorder %v150, %v201
    %vm203 = vmand %vm193, %vm202
    %vm204 = vmand %vm194, %vm202
    %v205 = vsel %vm203, 1.0, %v185
    %v206 = vsel %vm204, 1.0, %v186
    %vm207 = vcmp.eq.s32.totalorder %v150, 2
    %vm208 = vcmp.eq.s32.totalorder %v147, %v195
    %vm209 = vmand %vm207, %vm208
    %v210 = vsel %vm209, 1.0, %v190
    %s211 = sld [smem:[#allocation3 + $0x3]]
    %s212 = sld [smem:[#allocation4 + $0x3]]
    %vm213 = vcmp.eq.s32.totalorder %v147, 3
    %vm214 = vcmp.eq.s32.totalorder %v148, 3
    %v215 = vstv %s211
    %vm216 = vcmp.eq.s32.totalorder %v150, %v215
    %vm217 = vmand %vm213, %vm216
    %vm218 = vmand %vm214, %vm216
    %v219 = vsel %vm217, 1.0, %v199
    %v220 = vsel %vm218, 1.0, %v200
    %v221 = vstv %s212
    %vm222 = vcmp.eq.s32.totalorder %v150, %v221
    %vm223 = vmand %vm213, %vm222
    %vm224 = vmand %vm214, %vm222
    %v225 = vsel %vm223, 1.0, %v205
    %v226 = vsel %vm224, 1.0, %v206
    %vm227 = vcmp.eq.s32.totalorder %v150, 3
    %vm228 = vcmp.eq.s32.totalorder %v147, %v215
    %vm229 = vmand %vm227, %vm228
    %v230 = vsel %vm229, 1.0, %v210
    %s231 = sld [smem:[#allocation3 + $0x4]]
    %s232 = sld [smem:[#allocation4 + $0x4]]
    %vm233 = vcmp.eq.s32.totalorder %v147, 4
    %vm234 = vcmp.eq.s32.totalorder %v148, 4
    %v235 = vstv %s231
    %vm236 = vcmp.eq.s32.totalorder %v150, %v235
    %vm237 = vmand %vm233, %vm236
    %vm238 = vmand %vm234, %vm236
    %v239 = vsel %vm237, 1.0, %v219
    %v240 = vsel %vm238, 1.0, %v220
    %v241 = vstv %s232
    %vm242 = vcmp.eq.s32.totalorder %v150, %v241
    %vm243 = vmand %vm233, %vm242
    %vm244 = vmand %vm234, %vm242
    %v245 = vsel %vm243, 1.0, %v225
    %v246 = vsel %vm244, 1.0, %v226
    %vm247 = vcmp.eq.s32.totalorder %v150, 4
    %vm248 = vcmp.eq.s32.totalorder %v147, %v235
    %vm249 = vmand %vm247, %vm248
    %v250 = vsel %vm249, 1.0, %v230
    %s251 = sld [smem:[#allocation3 + $0x5]]
    %s252 = sld [smem:[#allocation4 + $0x5]]
    %vm253 = vcmp.eq.s32.totalorder %v147, 5
    %vm254 = vcmp.eq.s32.totalorder %v148, 5
    %v255 = vstv %s251
    %vm256 = vcmp.eq.s32.totalorder %v150, %v255
    %vm257 = vmand %vm253, %vm256
    %vm258 = vmand %vm254, %vm256
    %v259 = vsel %vm257, 1.0, %v239
    %v260 = vsel %vm258, 1.0, %v240
    %v261 = vstv %s252
    %vm262 = vcmp.eq.s32.totalorder %v150, %v261
    %vm263 = vmand %vm253, %vm262
    %vm264 = vmand %vm254, %vm262
    %v265 = vsel %vm263, 1.0, %v245
    %v266 = vsel %vm264, 1.0, %v246
    %vm267 = vcmp.eq.s32.totalorder %v150, 5
    %vm268 = vcmp.eq.s32.totalorder %v147, %v255
    %vm269 = vmand %vm267, %vm268
    %v270 = vsel %vm269, 1.0, %v250
    %s271 = sld [smem:[#allocation3 + $0x6]]
    %s272 = sld [smem:[#allocation4 + $0x6]]
    %vm273 = vcmp.eq.s32.totalorder %v147, 6
    %vm274 = vcmp.eq.s32.totalorder %v148, 6
    %v275 = vstv %s271
    %vm276 = vcmp.eq.s32.totalorder %v150, %v275
    %vm277 = vmand %vm273, %vm276
    %vm278 = vmand %vm274, %vm276
    %v279 = vsel %vm277, 1.0, %v259
    %v280 = vsel %vm278, 1.0, %v260
    %v281 = vstv %s272
    %vm282 = vcmp.eq.s32.totalorder %v150, %v281
    %vm283 = vmand %vm273, %vm282
    %vm284 = vmand %vm274, %vm282
    %v285 = vsel %vm283, 1.0, %v265
    %v286 = vsel %vm284, 1.0, %v266
    %vm287 = vcmp.eq.s32.totalorder %v150, 6
    %vm288 = vcmp.eq.s32.totalorder %v147, %v275
    %vm289 = vmand %vm287, %vm288
    %v290 = vsel %vm289, 1.0, %v270
    %s291 = sld [smem:[#allocation3 + $0x7]]
    %s292 = sld [smem:[#allocation4 + $0x7]]
    %vm293 = vcmp.eq.s32.totalorder %v147, 7
    %vm294 = vcmp.eq.s32.totalorder %v148, 7
    %v295 = vstv %s291
    %vm296 = vcmp.eq.s32.totalorder %v150, %v295
    %vm297 = vmand %vm293, %vm296
    %vm298 = vmand %vm294, %vm296
    %v299 = vsel %vm297, 1.0, %v279
    %v300 = vsel %vm298, 1.0, %v280
    %v301 = vstv %s292
    %vm302 = vcmp.eq.s32.totalorder %v150, %v301
    %vm303 = vmand %vm293, %vm302
    %vm304 = vmand %vm294, %vm302
    %v305 = vsel %vm303, 1.0, %v285
    %v306 = vsel %vm304, 1.0, %v286
    %vm307 = vcmp.eq.s32.totalorder %v150, 7
    %vm308 = vcmp.eq.s32.totalorder %v147, %v295
    %vm309 = vmand %vm307, %vm308
    %v310 = vsel %vm309, 1.0, %v290
    %s311 = sld [smem:[#allocation3 + $0x8]]
    %s312 = sld [smem:[#allocation4 + $0x8]]
    %vm313 = vcmp.eq.s32.totalorder %v147, 8
    %vm314 = vcmp.eq.s32.totalorder %v148, 8
    %v315 = vstv %s311
    %vm316 = vcmp.eq.s32.totalorder %v150, %v315
    %vm317 = vmand %vm313, %vm316
    %vm318 = vmand %vm314, %vm316
    %v319 = vsel %vm317, 1.0, %v299
    %v320 = vsel %vm318, 1.0, %v300
    %v321 = vstv %s312
    %vm322 = vcmp.eq.s32.totalorder %v150, %v321
    %vm323 = vmand %vm313, %vm322
    %vm324 = vmand %vm314, %vm322
    %v325 = vsel %vm323, 1.0, %v305
    %v326 = vsel %vm324, 1.0, %v306
    %vm327 = vcmp.eq.s32.totalorder %v150, 8
    %vm328 = vcmp.eq.s32.totalorder %v147, %v315
    %vm329 = vmand %vm327, %vm328
    %v330 = vsel %vm329, 1.0, %v310
    %s331 = sld [smem:[#allocation3 + $0x9]]
    %s332 = sld [smem:[#allocation4 + $0x9]]
    %vm333 = vcmp.eq.s32.totalorder %v147, 9
    %vm334 = vcmp.eq.s32.totalorder %v148, 9
    %v335 = vstv %s331
    %vm336 = vcmp.eq.s32.totalorder %v150, %v335
    %vm337 = vmand %vm333, %vm336
    %vm338 = vmand %vm334, %vm336
    %v339 = vsel %vm337, 1.0, %v319
    %v340 = vsel %vm338, 1.0, %v320
    %v341 = vstv %s332
    %vm342 = vcmp.eq.s32.totalorder %v150, %v341
    %vm343 = vmand %vm333, %vm342
    %vm344 = vmand %vm334, %vm342
    %v345 = vsel %vm343, 1.0, %v325
    %v346 = vsel %vm344, 1.0, %v326
    %vm347 = vcmp.eq.s32.totalorder %v150, 9
    %vm348 = vcmp.eq.s32.totalorder %v147, %v335
    %vm349 = vmand %vm347, %vm348
    %v350 = vsel %vm349, 1.0, %v330
    %s351 = sld [smem:[#allocation3 + $0xa]]
    %s352 = sld [smem:[#allocation4 + $0xa]]
    %vm353 = vcmp.eq.s32.totalorder %v147, 10
    %vm354 = vcmp.eq.s32.totalorder %v148, 10
    %v355 = vstv %s351
    %vm356 = vcmp.eq.s32.totalorder %v150, %v355
    %vm357 = vmand %vm353, %vm356
    %vm358 = vmand %vm354, %vm356
    %v359 = vsel %vm357, 1.0, %v339
    %v360 = vsel %vm358, 1.0, %v340
    %v361 = vstv %s352
    %vm362 = vcmp.eq.s32.totalorder %v150, %v361
    %vm363 = vmand %vm353, %vm362
    %vm364 = vmand %vm354, %vm362
    %v365 = vsel %vm363, 1.0, %v345
    %v366 = vsel %vm364, 1.0, %v346
    %vm367 = vcmp.eq.s32.totalorder %v150, 10
    %vm368 = vcmp.eq.s32.totalorder %v147, %v355
    %vm369 = vmand %vm367, %vm368
    %v370 = vsel %vm369, 1.0, %v350
    %s371 = sld [smem:[#allocation3 + $0xb]]
    %s372 = sld [smem:[#allocation4 + $0xb]]
    %vm373 = vcmp.eq.s32.totalorder %v147, 11
    %vm374 = vcmp.eq.s32.totalorder %v148, 11
    %v375 = vstv %s371
    %vm376 = vcmp.eq.s32.totalorder %v150, %v375
    %vm377 = vmand %vm373, %vm376
    %vm378 = vmand %vm374, %vm376
    %v379 = vsel %vm377, 1.0, %v359
    %v380 = vsel %vm378, 1.0, %v360
    %v381 = vstv %s372
    %vm382 = vcmp.eq.s32.totalorder %v150, %v381
    %vm383 = vmand %vm373, %vm382
    %vm384 = vmand %vm374, %vm382
    %v385 = vsel %vm383, 1.0, %v365
    %v386 = vsel %vm384, 1.0, %v366
    %vm387 = vcmp.eq.s32.totalorder %v150, 11
    %vm388 = vcmp.eq.s32.totalorder %v147, %v375
    %vm389 = vmand %vm387, %vm388
    %v390 = vsel %vm389, 1.0, %v370
    %s391 = sld [smem:[#allocation3 + $0xc]]
    %s392 = sld [smem:[#allocation4 + $0xc]]
    %vm393 = vcmp.eq.s32.totalorder %v147, 12
    %vm394 = vcmp.eq.s32.totalorder %v148, 12
    %v395 = vstv %s391
    %vm396 = vcmp.eq.s32.totalorder %v150, %v395
    %vm397 = vmand %vm393, %vm396
    %vm398 = vmand %vm394, %vm396
    %v399 = vsel %vm397, 1.0, %v379
    %v400 = vsel %vm398, 1.0, %v380
    %v401 = vstv %s392
    %vm402 = vcmp.eq.s32.totalorder %v150, %v401
    %vm403 = vmand %vm393, %vm402
    %vm404 = vmand %vm394, %vm402
    %v405 = vsel %vm403, 1.0, %v385
    %v406 = vsel %vm404, 1.0, %v386
    %vm407 = vcmp.eq.s32.totalorder %v150, 12
    %vm408 = vcmp.eq.s32.totalorder %v147, %v395
    %vm409 = vmand %vm407, %vm408
    %v410 = vsel %vm409, 1.0, %v390
    %s411 = sld [smem:[#allocation3 + $0xd]]
    %s412 = sld [smem:[#allocation4 + $0xd]]
    %vm413 = vcmp.eq.s32.totalorder %v147, 13
    %vm414 = vcmp.eq.s32.totalorder %v148, 13
    %v415 = vstv %s411
    %vm416 = vcmp.eq.s32.totalorder %v150, %v415
    %vm417 = vmand %vm413, %vm416
    %vm418 = vmand %vm414, %vm416
    %v419 = vsel %vm417, 1.0, %v399
    %v420 = vsel %vm418, 1.0, %v400
    %v421 = vstv %s412
    %vm422 = vcmp.eq.s32.totalorder %v150, %v421
    %vm423 = vmand %vm413, %vm422
    %vm424 = vmand %vm414, %vm422
    %v425 = vsel %vm423, 1.0, %v405
    %v426 = vsel %vm424, 1.0, %v406
    %vm427 = vcmp.eq.s32.totalorder %v150, 13
    %vm428 = vcmp.eq.s32.totalorder %v147, %v415
    %vm429 = vmand %vm427, %vm428
    %v430 = vsel %vm429, 1.0, %v410
    %s431 = sld [smem:[#allocation3 + $0xe]]
    %s432 = sld [smem:[#allocation4 + $0xe]]
    %vm433 = vcmp.eq.s32.totalorder %v147, 14
    %vm434 = vcmp.eq.s32.totalorder %v148, 14
    %v435 = vstv %s431
    %vm436 = vcmp.eq.s32.totalorder %v150, %v435
    %vm437 = vmand %vm433, %vm436
    %vm438 = vmand %vm434, %vm436
    %v439 = vsel %vm437, 1.0, %v419
    %v440 = vsel %vm438, 1.0, %v420
    %v441 = vstv %s432
    %vm442 = vcmp.eq.s32.totalorder %v150, %v441
    %vm443 = vmand %vm433, %vm442
    %vm444 = vmand %vm434, %vm442
    %v445 = vsel %vm443, 1.0, %v425
    %v446 = vsel %vm444, 1.0, %v426
    %vm447 = vcmp.eq.s32.totalorder %v150, 14
    %vm448 = vcmp.eq.s32.totalorder %v147, %v435
    %vm449 = vmand %vm447, %vm448
    %v450 = vsel %vm449, 1.0, %v430
    %s451 = sld [smem:[#allocation3 + $0xf]]
    %s452 = sld [smem:[#allocation4 + $0xf]]
    %vm453 = vcmp.eq.s32.totalorder %v147, 15
    %vm454 = vcmp.eq.s32.totalorder %v148, 15
    %v455 = vstv %s451
    %vm456 = vcmp.eq.s32.totalorder %v150, %v455
    %vm457 = vmand %vm453, %vm456
    %vm458 = vmand %vm454, %vm456
    %v459 = vsel %vm457, 1.0, %v439
    %v460 = vsel %vm458, 1.0, %v440
    %v461 = vstv %s452
    %vm462 = vcmp.eq.s32.totalorder %v150, %v461
    %vm463 = vmand %vm453, %vm462
    %vm464 = vmand %vm454, %vm462
    %v465 = vsel %vm463, 1.0, %v445
    %v466 = vsel %vm464, 1.0, %v446
    %vm467 = vcmp.eq.s32.totalorder %v150, 15
    %vm468 = vcmp.eq.s32.totalorder %v147, %v455
    %vm469 = vmand %vm467, %vm468
    %v470 = vsel %vm469, 1.0, %v450
    %v471 = vld [vmem:[#allocation5] sm:$0xff]
    %vm472 = vcmask 64512
    %v474 = vsel %vm472, %v459, 0
    %v477 = vsel %vm472, %v460, 0
    %479 = vmatpush.msra.mxu0 0.0
    %480 = vmatpush.msra.mxu0 0.0
    %481 = vmatpush.msra.mxu0 0.0
    %482 = vmatpush.msra.mxu0 0.0
    %483 = vmatpush.msra.mxu0 0.0
    %484 = vmatpush.msra.mxu0 0.0
    %485 = vmatpush.msra.mxu0 0.0
    %486 = vmatpush.msra.mxu0 0.0
    %487 = vmatpush.msra.mxu0 0.0
    %488 = vmatpush.msra.mxu0 0.0
    %489 = vmatpush.msra.mxu0 0.0
    %490 = vmatpush.msra.mxu0 0.0
    %491 = vmatpush.msra.mxu0 0.0
    %492 = vmatpush.msra.mxu0 0.0
    %493 = vmatpush.msra.mxu0 0.0
    %494 = vmatpush.msra.mxu0 %v471
    %495 = vmatmul.f32.gmra.mxu0 %v474
    %v496 = vpop.f32.mrf.mxu0
    %v497 = vadd.f32 0.0, %v496
    %498 = vmatmul.f32.gmra.mxu0 %v477
    %v499 = vpop.f32.mrf.mxu0
    %v500 = vadd.f32 0.0, %v499
    %501 = vdwg.mxu0
    %v503 = vsel %vm472, %v465, 0
    %v506 = vsel %vm472, %v466, 0
    %508 = vmatpush.msra.mxu0 0.0
    %509 = vmatpush.msra.mxu0 0.0
    %510 = vmatpush.msra.mxu0 0.0
    %511 = vmatpush.msra.mxu0 0.0
    %512 = vmatpush.msra.mxu0 0.0
    %513 = vmatpush.msra.mxu0 0.0
    %514 = vmatpush.msra.mxu0 0.0
    %515 = vmatpush.msra.mxu0 0.0
    %516 = vmatpush.msra.mxu0 0.0
    %517 = vmatpush.msra.mxu0 0.0
    %518 = vmatpush.msra.mxu0 0.0
    %519 = vmatpush.msra.mxu0 0.0
    %520 = vmatpush.msra.mxu0 0.0
    %521 = vmatpush.msra.mxu0 0.0
    %522 = vmatpush.msra.mxu0 0.0
    %523 = vmatpush.msra.mxu0 %v471
    %524 = vmatmul.f32.gmra.mxu0 %v503
    %v525 = vpop.f32.mrf.mxu0
    %v526 = vadd.f32 0.0, %v525
    %527 = vmatmul.f32.gmra.mxu0 %v506
    %v528 = vpop.f32.mrf.mxu0
    %v529 = vadd.f32 0.0, %v528
    %530 = vdwg.mxu0
    %v531 = vld [vmem:[#allocation8] sm:$0xff]
    %v532 = vld [vmem:[#allocation8 + $0x8] sm:$0xff]
    %v533 = vld [vmem:[#allocation10] sm:$0xff]
    %v534 = vld [vmem:[#allocation10 + $0x8] sm:$0xff]
    %v535 = vld [vmem:[#allocation10 + $0x10] sm:$0xff]
    %v536 = vld [vmem:[#allocation10 + $0x18] sm:$0xff]
    %v537 = vld [vmem:[#allocation10 + $0x20] sm:$0xff]
    %v538 = vld [vmem:[#allocation10 + $0x28] sm:$0xff]
    %v539 = vld [vmem:[#allocation10 + $0x30] sm:$0xff]
    %v540 = vld [vmem:[#allocation10 + $0x38] sm:$0xff]
    %v541 = vld [vmem:[#allocation10 + $0x40] sm:$0xff]
    %v542 = vld [vmem:[#allocation10 + $0x48] sm:$0xff]
    %v543 = vld [vmem:[#allocation10 + $0x50] sm:$0xff]
    %v544 = vld [vmem:[#allocation10 + $0x58] sm:$0xff]
    %v545 = vld [vmem:[#allocation10 + $0x60] sm:$0xff]
    %v546 = vld [vmem:[#allocation10 + $0x68] sm:$0xff]
    %v547 = vld [vmem:[#allocation10 + $0x70] sm:$0xff]
    %v548 = vld [vmem:[#allocation10 + $0x78] sm:$0xff]
    %v549 = vld [vmem:[#allocation10 + $0x80] sm:$0xff]
    %v550 = vld [vmem:[#allocation10 + $0x88] sm:$0xff]
    %v551 = vld [vmem:[#allocation10 + $0x90] sm:$0xff]
    %v552 = vld [vmem:[#allocation10 + $0x98] sm:$0xff]
    %v553 = vld [vmem:[#allocation10 + $0xa0] sm:$0xff]
    %v554 = vld [vmem:[#allocation10 + $0xa8] sm:$0xff]
    %v555 = vld [vmem:[#allocation10 + $0xb0] sm:$0xff]
    %v556 = vld [vmem:[#allocation10 + $0xb8] sm:$0xff]
    %v557 = vld [vmem:[#allocation10 + $0xc0] sm:$0xff]
    %v558 = vld [vmem:[#allocation10 + $0xc8] sm:$0xff]
    %v559 = vld [vmem:[#allocation10 + $0xd0] sm:$0xff]
    %v560 = vld [vmem:[#allocation10 + $0xd8] sm:$0xff]
    %v561 = vld [vmem:[#allocation10 + $0xe0] sm:$0xff]
    %v562 = vld [vmem:[#allocation10 + $0xe8] sm:$0xff]
    %v563 = vld [vmem:[#allocation10 + $0xf0] sm:$0xff]
    %v564 = vld [vmem:[#allocation10 + $0xf8] sm:$0xff]
    %v565 = vld [vmem:[#allocation10 + $0x100] sm:$0xff]
    %v566 = vld [vmem:[#allocation10 + $0x108] sm:$0xff]
    %v567 = vld [vmem:[#allocation10 + $0x110] sm:$0xff]
    %v568 = vld [vmem:[#allocation10 + $0x118] sm:$0xff]
    %v569 = vld [vmem:[#allocation10 + $0x120] sm:$0xff]
    %v570 = vld [vmem:[#allocation10 + $0x128] sm:$0xff]
    %v571 = vld [vmem:[#allocation10 + $0x130] sm:$0xff]
    %v572 = vld [vmem:[#allocation10 + $0x138] sm:$0xff]
    %v573 = vld [vmem:[#allocation10 + $0x140] sm:$0xff]
    %v574 = vld [vmem:[#allocation10 + $0x148] sm:$0xff]
    %v575 = vld [vmem:[#allocation10 + $0x150] sm:$0xff]
    %v576 = vld [vmem:[#allocation10 + $0x158] sm:$0xff]
    %v577 = vld [vmem:[#allocation10 + $0x160] sm:$0xff]
    %v578 = vld [vmem:[#allocation10 + $0x168] sm:$0xff]
    %v579 = vld [vmem:[#allocation10 + $0x170] sm:$0xff]
    %v580 = vld [vmem:[#allocation10 + $0x178] sm:$0xff]
    %v581 = vld [vmem:[%s5] sm:$0x1]
    %v583 = vperm.slane %v581, 0
    %585 = vmatpush.msra.mxu0 %v548
    %586 = vmatpush.msra.mxu0 %v547
    %587 = vmatpush.msra.mxu0 %v546
    %588 = vmatpush.msra.mxu0 %v545
    %589 = vmatpush.msra.mxu0 %v544
    %590 = vmatpush.msra.mxu0 %v543
    %591 = vmatpush.msra.mxu0 %v542
    %592 = vmatpush.msra.mxu0 %v541
    %593 = vmatpush.msra.mxu0 %v540
    %594 = vmatpush.msra.mxu0 %v539
    %595 = vmatpush.msra.mxu0 %v538
    %596 = vmatpush.msra.mxu0 %v537
    %597 = vmatpush.msra.mxu0 %v536
    %598 = vmatpush.msra.mxu0 %v535
    %599 = vmatpush.msra.mxu0 %v534
    %600 = vmatpush.msra.mxu0 %v533
    %601 = vmatmul.f32.gmra.mxu0 %v497
    %v602 = vpop.f32.mrf.mxu0
    %v603 = vadd.f32 %v583, %v602
    %604 = vmatmul.f32.gmra.mxu0 %v500
    %v605 = vpop.f32.mrf.mxu0
    %v606 = vadd.f32 %v583, %v605
    %607 = vdwg.mxu0
    %608 = vmatpush.msra.mxu0 %v564
    %609 = vmatpush.msra.mxu0 %v563
    %610 = vmatpush.msra.mxu0 %v562
    %611 = vmatpush.msra.mxu0 %v561
    %612 = vmatpush.msra.mxu0 %v560
    %613 = vmatpush.msra.mxu0 %v559
    %614 = vmatpush.msra.mxu0 %v558
    %615 = vmatpush.msra.mxu0 %v557
    %616 = vmatpush.msra.mxu0 %v556
    %617 = vmatpush.msra.mxu0 %v555
    %618 = vmatpush.msra.mxu0 %v554
    %619 = vmatpush.msra.mxu0 %v553
    %620 = vmatpush.msra.mxu0 %v552
    %621 = vmatpush.msra.mxu0 %v551
    %622 = vmatpush.msra.mxu0 %v550
    %623 = vmatpush.msra.mxu0 %v549
    %624 = vmatmul.f32.gmra.mxu0 %v526
    %v625 = vpop.f32.mrf.mxu0
    %v626 = vadd.f32 %v603, %v625
    %627 = vmatmul.f32.gmra.mxu0 %v529
    %v628 = vpop.f32.mrf.mxu0
    %v629 = vadd.f32 %v606, %v628
    %630 = vdwg.mxu0
    %631 = vmatpush.msra.mxu0 %v580
    %632 = vmatpush.msra.mxu0 %v579
    %633 = vmatpush.msra.mxu0 %v578
    %634 = vmatpush.msra.mxu0 %v577
    %635 = vmatpush.msra.mxu0 %v576
    %636 = vmatpush.msra.mxu0 %v575
    %637 = vmatpush.msra.mxu0 %v574
    %638 = vmatpush.msra.mxu0 %v573
    %639 = vmatpush.msra.mxu0 %v572
    %640 = vmatpush.msra.mxu0 %v571
    %641 = vmatpush.msra.mxu0 %v570
    %642 = vmatpush.msra.mxu0 %v569
    %643 = vmatpush.msra.mxu0 %v568
    %644 = vmatpush.msra.mxu0 %v567
    %645 = vmatpush.msra.mxu0 %v566
    %646 = vmatpush.msra.mxu0 %v565
    %647 = vmatmul.f32.gmra.mxu0 %v531
    %v648 = vpop.f32.mrf.mxu0
    %v649 = vadd.f32 %v626, %v648
    %650 = vmatmul.f32.gmra.mxu0 %v532
    %v651 = vpop.f32.mrf.mxu0
    %v652 = vadd.f32 %v629, %v651
    %653 = vdwg.mxu0
    %v654 = vxor.u32 %v649, 2147483648
    %v655 = vxor.u32 %v652, 2147483648
    %v656 = vmul.f32 %v654, 1.442695
    %v657 = vpow.pop %v656
    %v658 = vmul.f32 %v655, 1.442695
    %v659 = vpow.pop %v658
    %v660 = vadd.f32 %v657, 1.0
    %v661 = vadd.f32 %v659, 1.0
    %v662 = vrcp.pop %v660
    %v663 = vmul.f32 %v660, %v662
    %v664 = vsub.f32 1.0, %v663
    %v665 = vmul.f32 %v662, %v664
    %v666 = vadd.f32 %v662, %v665
    %vm667 = vweird.f32 %v660
    %vm668 = vweird.f32 %v662
    %vm669 = vmor %vm667, %vm668
    %v670 = vsel %vm669, %v662, %v666
    %v671 = vand.u32 2147483647, %v660
    %vm672 = vcmp.eq.f32.partialorder %v671, 8.507059e+37
    %v673 = vand.u32 %v660, 2147483648
    %v674 = vor.u32 1.1754944e-38, %v673
    %v675 = vsel %vm672, %v674, %v670
    %v676 = vmul.f32 1.0, %v675
    %v677 = vrcp.pop %v661
    %v678 = vmul.f32 %v661, %v677
    %v679 = vsub.f32 1.0, %v678
    %v680 = vmul.f32 %v677, %v679
    %v681 = vadd.f32 %v677, %v680
    %vm682 = vweird.f32 %v661
    %vm683 = vweird.f32 %v677
    %vm684 = vmor %vm682, %vm683
    %v685 = vsel %vm684, %v677, %v681
    %v686 = vand.u32 2147483647, %v661
    %vm687 = vcmp.eq.f32.partialorder %v686, 8.507059e+37
    %v688 = vand.u32 %v661, 2147483648
    %v689 = vor.u32 1.1754944e-38, %v688
    %v690 = vsel %vm687, %v689, %v685
    %v691 = vmul.f32 1.0, %v690
    %v692 = vmul.f32 %v649, %v676
    %v693 = vmul.f32 %v652, %v691
    %v694 = vld [vmem:[#allocation11] sm:$0xff]
    %v695 = vld [vmem:[#allocation11 + $0x8] sm:$0xff]
    %v696 = vld [vmem:[#allocation11 + $0x10] sm:$0xff]
    %v697 = vld [vmem:[#allocation11 + $0x18] sm:$0xff]
    %v698 = vld [vmem:[#allocation11 + $0x20] sm:$0xff]
    %v699 = vld [vmem:[#allocation11 + $0x28] sm:$0xff]
    %v700 = vld [vmem:[#allocation11 + $0x30] sm:$0xff]
    %v701 = vld [vmem:[#allocation11 + $0x38] sm:$0xff]
    %v702 = vld [vmem:[#allocation11 + $0x40] sm:$0xff]
    %v703 = vld [vmem:[#allocation11 + $0x48] sm:$0xff]
    %v704 = vld [vmem:[#allocation11 + $0x50] sm:$0xff]
    %v705 = vld [vmem:[#allocation11 + $0x58] sm:$0xff]
    %v706 = vld [vmem:[#allocation11 + $0x60] sm:$0xff]
    %v707 = vld [vmem:[#allocation11 + $0x68] sm:$0xff]
    %v708 = vld [vmem:[#allocation11 + $0x70] sm:$0xff]
    %v709 = vld [vmem:[#allocation11 + $0x78] sm:$0xff]
    %v710 = vld [vmem:[%s7] sm:$0x1]
    %v712 = vperm.slane %v710, 0
    %714 = vmatpush.msra.mxu0 %v709
    %715 = vmatpush.msra.mxu0 %v708
    %716 = vmatpush.msra.mxu0 %v707
    %717 = vmatpush.msra.mxu0 %v706
    %718 = vmatpush.msra.mxu0 %v705
    %719 = vmatpush.msra.mxu0 %v704
    %720 = vmatpush.msra.mxu0 %v703
    %721 = vmatpush.msra.mxu0 %v702
    %722 = vmatpush.msra.mxu0 %v701
    %723 = vmatpush.msra.mxu0 %v700
    %724 = vmatpush.msra.mxu0 %v699
    %725 = vmatpush.msra.mxu0 %v698
    %726 = vmatpush.msra.mxu0 %v697
    %727 = vmatpush.msra.mxu0 %v696
    %728 = vmatpush.msra.mxu0 %v695
    %729 = vmatpush.msra.mxu0 %v694
    %730 = vmatmul.f32.gmra.mxu0 %v692
    %v731 = vpop.f32.mrf.mxu0
    %v732 = vadd.f32 %v712, %v731
    %733 = vmatmul.f32.gmra.mxu0 %v693
    %v734 = vpop.f32.mrf.mxu0
    %v735 = vadd.f32 %v712, %v734
    %736 = vdwg.mxu0
    %v737 = vxor.u32 %v732, 2147483648
    %v738 = vxor.u32 %v735, 2147483648
    %v739 = vmul.f32 %v737, 1.442695
    %v740 = vpow.pop %v739
    %v741 = vmul.f32 %v738, 1.442695
    %v742 = vpow.pop %v741
    %v743 = vadd.f32 %v740, 1.0
    %v744 = vadd.f32 %v742, 1.0
    %v745 = vrcp.pop %v743
    %v746 = vmul.f32 %v743, %v745
    %v747 = vsub.f32 1.0, %v746
    %v748 = vmul.f32 %v745, %v747
    %v749 = vadd.f32 %v745, %v748
    %vm750 = vweird.f32 %v743
    %vm751 = vweird.f32 %v745
    %vm752 = vmor %vm750, %vm751
    %v753 = vsel %vm752, %v745, %v749
    %v754 = vand.u32 2147483647, %v743
    %vm755 = vcmp.eq.f32.partialorder %v754, 8.507059e+37
    %v756 = vand.u32 %v743, 2147483648
    %v757 = vor.u32 1.1754944e-38, %v756
    %v758 = vsel %vm755, %v757, %v753
    %v759 = vmul.f32 1.0, %v758
    %v760 = vrcp.pop %v744
    %v761 = vmul.f32 %v744, %v760
    %v762 = vsub.f32 1.0, %v761
    %v763 = vmul.f32 %v760, %v762
    %v764 = vadd.f32 %v760, %v763
    %vm765 = vweird.f32 %v744
    %vm766 = vweird.f32 %v760
    %vm767 = vmor %vm765, %vm766
    %v768 = vsel %vm767, %v760, %v764
    %v769 = vand.u32 2147483647, %v744
    %vm770 = vcmp.eq.f32.partialorder %v769, 8.507059e+37
    %v771 = vand.u32 %v744, 2147483648
    %v772 = vor.u32 1.1754944e-38, %v771
    %v773 = vsel %vm770, %v772, %v768
    %v774 = vmul.f32 1.0, %v773
    %v775 = vmul.f32 %v732, %v759
    %v776 = vmul.f32 %v735, %v774
    %777 = vst [vmem:[#allocation17] sm:$0xff] %v775
    %778 = vst [vmem:[#allocation17 + $0x8] sm:$0xff] %v776
    %vm779 = vcmask 130048
    %v781 = vsel %vm779, %v470, 0
    %783 = vmatpush.msra.mxu0 0.0
    %784 = vmatpush.msra.mxu0 0.0
    %785 = vmatpush.msra.mxu0 0.0
    %786 = vmatpush.msra.mxu0 0.0
    %787 = vmatpush.msra.mxu0 0.0
    %788 = vmatpush.msra.mxu0 0.0
    %789 = vmatpush.msra.mxu0 0.0
    %790 = vmatpush.msra.mxu0 0.0
    %791 = vmatpush.msra.mxu0 0.0
    %792 = vmatpush.msra.mxu0 0.0
    %793 = vmatpush.msra.mxu0 0.0
    %794 = vmatpush.msra.mxu0 0.0
    %795 = vmatpush.msra.mxu0 0.0
    %796 = vmatpush.msra.mxu0 0.0
    %797 = vmatpush.msra.mxu0 %v776
    %798 = vmatpush.msra.mxu0 %v775
    %799 = vmatmul.f32.gmra.mxu0 %v781
    %v800 = vpop.f32.mrf.mxu0
    %v801 = vadd.f32 0.0, %v800
    %802 = vdwg.mxu0
    %v803 = vld [vmem:[#allocation13] sm:$0xff]
    %v804 = vld [vmem:[#allocation13 + $0x8] sm:$0xff]
    %v805 = vld [vmem:[#allocation13 + $0x10] sm:$0xff]
    %v806 = vld [vmem:[#allocation13 + $0x18] sm:$0xff]
    %v807 = vld [vmem:[#allocation13 + $0x20] sm:$0xff]
    %v808 = vld [vmem:[#allocation13 + $0x28] sm:$0xff]
    %v809 = vld [vmem:[#allocation13 + $0x30] sm:$0xff]
    %v810 = vld [vmem:[#allocation13 + $0x38] sm:$0xff]
    %v811 = vld [vmem:[#allocation13 + $0x40] sm:$0xff]
    %v812 = vld [vmem:[#allocation13 + $0x48] sm:$0xff]
    %v813 = vld [vmem:[#allocation13 + $0x50] sm:$0xff]
    %v814 = vld [vmem:[#allocation13 + $0x58] sm:$0xff]
    %v815 = vld [vmem:[#allocation13 + $0x60] sm:$0xff]
    %v816 = vld [vmem:[#allocation13 + $0x68] sm:$0xff]
    %v817 = vld [vmem:[#allocation13 + $0x70] sm:$0xff]
    %v818 = vld [vmem:[#allocation13 + $0x78] sm:$0xff]
    %v819 = vld [vmem:[#allocation13 + $0x80] sm:$0xff]
    %v820 = vld [vmem:[#allocation13 + $0x88] sm:$0xff]
    %v821 = vld [vmem:[#allocation13 + $0x90] sm:$0xff]
    %v822 = vld [vmem:[#allocation13 + $0x98] sm:$0xff]
    %v823 = vld [vmem:[#allocation13 + $0xa0] sm:$0xff]
    %v824 = vld [vmem:[#allocation13 + $0xa8] sm:$0xff]
    %v825 = vld [vmem:[#allocation13 + $0xb0] sm:$0xff]
    %v826 = vld [vmem:[#allocation13 + $0xb8] sm:$0xff]
    %v827 = vld [vmem:[#allocation13 + $0xc0] sm:$0xff]
    %v828 = vld [vmem:[#allocation13 + $0xc8] sm:$0xff]
    %v829 = vld [vmem:[#allocation13 + $0xd0] sm:$0xff]
    %v830 = vld [vmem:[#allocation13 + $0xd8] sm:$0xff]
    %v831 = vld [vmem:[#allocation13 + $0xe0] sm:$0xff]
    %v832 = vld [vmem:[#allocation13 + $0xe8] sm:$0xff]
    %v833 = vld [vmem:[#allocation13 + $0xf0] sm:$0xff]
    %v834 = vld [vmem:[#allocation13 + $0xf8] sm:$0xff]
    %v835 = vld [vmem:[%s9] sm:$0x1]
    %v837 = vperm.slane %v835, 0
    %839 = vmatpush.msra.mxu0 %v818
    %840 = vmatpush.msra.mxu0 %v817
    %841 = vmatpush.msra.mxu0 %v816
    %842 = vmatpush.msra.mxu0 %v815
    %843 = vmatpush.msra.mxu0 %v814
    %844 = vmatpush.msra.mxu0 %v813
    %845 = vmatpush.msra.mxu0 %v812
    %846 = vmatpush.msra.mxu0 %v811
    %847 = vmatpush.msra.mxu0 %v810
    %848 = vmatpush.msra.mxu0 %v809
    %849 = vmatpush.msra.mxu0 %v808
    %850 = vmatpush.msra.mxu0 %v807
    %851 = vmatpush.msra.mxu0 %v806
    %852 = vmatpush.msra.mxu0 %v805
    %853 = vmatpush.msra.mxu0 %v804
    %854 = vmatpush.msra.mxu0 %v803
    %855 = vmatmul.f32.gmra.mxu0 %v471
    %v856 = vpop.f32.mrf.mxu0
    %v857 = vadd.f32 %v837, %v856
    %858 = vdwg.mxu0
    %859 = vmatpush.msra.mxu0 %v834
    %860 = vmatpush.msra.mxu0 %v833
    %861 = vmatpush.msra.mxu0 %v832
    %862 = vmatpush.msra.mxu0 %v831
    %863 = vmatpush.msra.mxu0 %v830
    %864 = vmatpush.msra.mxu0 %v829
    %865 = vmatpush.msra.mxu0 %v828
    %866 = vmatpush.msra.mxu0 %v827
    %867 = vmatpush.msra.mxu0 %v826
    %868 = vmatpush.msra.mxu0 %v825
    %869 = vmatpush.msra.mxu0 %v824
    %870 = vmatpush.msra.mxu0 %v823
    %871 = vmatpush.msra.mxu0 %v822
    %872 = vmatpush.msra.mxu0 %v821
    %873 = vmatpush.msra.mxu0 %v820
    %874 = vmatpush.msra.mxu0 %v819
    %875 = vmatmul.f32.gmra.mxu0 %v801
    %v876 = vpop.f32.mrf.mxu0
    %v877 = vadd.f32 %v857, %v876
    %878 = vdwg.mxu0
    %v879 = vxor.u32 %v877, 2147483648
    %v880 = vmul.f32 %v879, 1.442695
    %v881 = vpow.pop %v880
    %v882 = vadd.f32 %v881, 1.0
    %v883 = vrcp.pop %v882
    %v884 = vmul.f32 %v882, %v883
    %v885 = vsub.f32 1.0, %v884
    %v886 = vmul.f32 %v883, %v885
    %v887 = vadd.f32 %v883, %v886
    %vm888 = vweird.f32 %v882
    %vm889 = vweird.f32 %v883
    %vm890 = vmor %vm888, %vm889
    %v891 = vsel %vm890, %v883, %v887
    %v892 = vand.u32 2147483647, %v882
    %vm893 = vcmp.eq.f32.partialorder %v892, 8.507059e+37
    %v894 = vand.u32 %v882, 2147483648
    %v895 = vor.u32 1.1754944e-38, %v894
    %v896 = vsel %vm893, %v895, %v891
    %v897 = vmul.f32 1.0, %v896
    %v898 = vmul.f32 %v877, %v897
    %v899 = vld [vmem:[#allocation14] sm:$0xff]
    %v900 = vld [vmem:[#allocation14 + $0x8] sm:$0xff]
    %v901 = vld [vmem:[#allocation14 + $0x10] sm:$0xff]
    %v902 = vld [vmem:[#allocation14 + $0x18] sm:$0xff]
    %v903 = vld [vmem:[#allocation14 + $0x20] sm:$0xff]
    %v904 = vld [vmem:[#allocation14 + $0x28] sm:$0xff]
    %v905 = vld [vmem:[#allocation14 + $0x30] sm:$0xff]
    %v906 = vld [vmem:[#allocation14 + $0x38] sm:$0xff]
    %v907 = vld [vmem:[#allocation14 + $0x40] sm:$0xff]
    %v908 = vld [vmem:[#allocation14 + $0x48] sm:$0xff]
    %v909 = vld [vmem:[#allocation14 + $0x50] sm:$0xff]
    %v910 = vld [vmem:[#allocation14 + $0x58] sm:$0xff]
    %v911 = vld [vmem:[#allocation14 + $0x60] sm:$0xff]
    %v912 = vld [vmem:[#allocation14 + $0x68] sm:$0xff]
    %v913 = vld [vmem:[#allocation14 + $0x70] sm:$0xff]
    %v914 = vld [vmem:[#allocation14 + $0x78] sm:$0xff]
    %v915 = vld [vmem:[%s11] sm:$0x1]
    %v917 = vperm.slane %v915, 0
    %919 = vmatpush.msra.mxu0 %v914
    %920 = vmatpush.msra.mxu0 %v913
    %921 = vmatpush.msra.mxu0 %v912
    %922 = vmatpush.msra.mxu0 %v911
    %923 = vmatpush.msra.mxu0 %v910
    %924 = vmatpush.msra.mxu0 %v909
    %925 = vmatpush.msra.mxu0 %v908
    %926 = vmatpush.msra.mxu0 %v907
    %927 = vmatpush.msra.mxu0 %v906
    %928 = vmatpush.msra.mxu0 %v905
    %929 = vmatpush.msra.mxu0 %v904
    %930 = vmatpush.msra.mxu0 %v903
    %931 = vmatpush.msra.mxu0 %v902
    %932 = vmatpush.msra.mxu0 %v901
    %933 = vmatpush.msra.mxu0 %v900
    %934 = vmatpush.msra.mxu0 %v899
    %935 = vmatmul.f32.gmra.mxu0 %v898
    %v936 = vpop.f32.mrf.mxu0
    %v937 = vadd.f32 %v917, %v936
    %938 = vdwg.mxu0
    %v939 = vadd.f32 %v471, %v937
    %940 = vst [vmem:[#allocation16] sm:$0xff] %v939
    // Predicated region
    $region66: #{tpu_custom_call.1} parent=1 // pred_check
      _
    $region67: #{tpu_custom_call.1} parent=1 // pred_check_branch
      %942 = sbr.rel (0) target = $region69
    $region68: #{tpu_custom_call.1} parent=1 // pred_region
      %944 = vsyncadd [#allocation7], 0
      %s946 = sshll.u32 [#allocation16], 4
      %s947 = int_to_ptr.vmem [resolvable:$true] %s946
      %s948 = sshll.u32 %s12, 4
      %s949 = int_to_ptr.hbm [resolvable:$true] %s948
      %951 = dma.vmem_to_hbm [thread:$0]  %s947, 128, %s949, [#allocation7]
    $region69: #{tpu_custom_call.1} parent=1 // pred_fallthru
      _
    // Predicated region
    $region70: #{tpu_custom_call.1} parent=1 // pred_check
      _
    $region71: #{tpu_custom_call.1} parent=1 // pred_check_branch
      %953 = sbr.rel (0) target = $region73
    $region72: #{tpu_custom_call.1} parent=1 // pred_region
      %955 = vsyncadd [#allocation18], 0
      %s956 = sshll.u32 [#allocation17], 4
      %s957 = int_to_ptr.vmem [resolvable:$true] %s956
      %s958 = sshll.u32 %s13, 4
      %s959 = int_to_ptr.hbm [resolvable:$true] %s958
      %964 = dma.vmem_to_hbm [thread:$0]  %s957, 256, %s959, [#allocation18], 128, 128, 8
    $region73: #{tpu_custom_call.1} parent=1 // pred_fallthru
      _
    // Predicated region
    $region74: #{tpu_custom_call.1} parent=1 // pred_check
      _
    $region75: #{tpu_custom_call.1} parent=1 // pred_check_branch
      %966 = sbr.rel (0) target = $region77
    $region76: #{tpu_custom_call.1} parent=1 // pred_region
      %968 = dma.done [#allocation7], 128
    $region77: #{tpu_custom_call.1} parent=1 // pred_fallthru
      _
    // Predicated region
    $region78: #{tpu_custom_call.1} parent=1 // pred_check
      _
    $region79: #{tpu_custom_call.1} parent=1 // pred_check_branch
      %970 = sbr.rel (0) target = $region81
    $region80: #{tpu_custom_call.1} parent=1 // pred_region
      %972 = dma.done [#allocation18], 256
    $region81: #{tpu_custom_call.1} parent=1 // pred_fallthru
      _
    %973 = vsyncpa [#allocation6], 1
    %974 = vsyncpa [#allocation9], 1
    %975 = vsyncpa [#allocation12], 1
    %976 = vsyncpa [#allocation15], 1
    %977 = vsyncpa [#allocation7], 1
    %978 = vsyncpa [#allocation18], 1

</llo_original>
